<compile_context>
chip_gen: v7x
topology: tpu7x:2x2x1
jax: 0.10.0
libtpu: 0.0.40
codegen_flags: <defaults>
</compile_context>

<pallas_src>
import functools

import jax
import jax.numpy as jnp
import numpy as np
from jax.experimental import pallas as pl
from jax.experimental.pallas import tpu as pltpu


def _cdiv(a, b):
    return -(-a // b)


# --------------------------------------------------------------------------
# Fused bottleneck kernel (one image per grid step)
# --------------------------------------------------------------------------
def _bottleneck_kernel(x_ref, wr_ref, br_ref, wc_ref, bc_ref, we_ref, be_ref,
                       *rest, stride, h_in, w_in, h_out, w_out, has_shortcut):
    """Refs:
      x_ref : (1, s*s, A, B, Cin) f32  stride-parity, zero-padded NHWC input
      wr_ref: (Cin, D)  bf16   conv_reduce weight (BN scale folded)
      br_ref: (1, D)    f32    bn_reduce bias
      wc_ref: (9, D, D) bf16   3x3 grouped conv as block-diag per-tap weights
      bc_ref: (1, D)    f32    bn bias
      we_ref: (D, Cout) bf16   conv_expand weight (BN scale folded)
      be_ref: (1, Cout) f32    bn_expand bias
      [ws_ref:(Cin,Cout) bf16, bs_ref:(1,Cout) f32]  shortcut conv (optional)
      o_ref : (1, Ho*Wo, Cout) bf16
      y_scr : (s*s, A, B, D) f32  zero-padded reduce output, parity layout
    """
    if has_shortcut:
        ws_ref, bs_ref, o_ref, y_scr = rest
    else:
        o_ref, y_scr = rest

    s = stride
    cin = x_ref.shape[-1]
    d = wr_ref.shape[1]
    m = h_out * w_out

    # ---- conv_reduce (1x1) + bn_reduce + ReLU, written in parity layout ----
    # Padded-border positions must stay exact zeros for the 3x3 conv, so zero
    # the scratch and only write the valid interior of each parity plane.
    y_scr[...] = jnp.zeros(y_scr.shape, y_scr.dtype)
    w_r = wr_ref[...]
    b_r = br_ref[...]
    for r in range(s):
        for c in range(s):
            p = r * s + c
            a_lo, a_hi = (1 if r == 0 else 0), (h_in - r) // s + 1
            b_lo, b_hi = (1 if c == 0 else 0), (w_in - c) // s + 1
            na, nb = a_hi - a_lo, b_hi - b_lo
            xa = x_ref[0, p, a_lo:a_hi, b_lo:b_hi, :].reshape(na * nb, cin)
            y = jnp.dot(xa.astype(jnp.bfloat16), w_r,
                        preferred_element_type=jnp.float32) + b_r
            y_scr[p, a_lo:a_hi, b_lo:b_hi, :] = (
                jnp.maximum(y, 0.0).reshape(na, nb, d))

    # ---- conv_conv: 3x3 grouped conv (stride s) + bn + ReLU ---------------
    # 9 accumulating lane-dense (M, D) @ (D, D) matmuls; every tap window is a
    # contiguous static slice of the parity-laid-out scratch.
    acc = jnp.zeros((m, d), jnp.float32)
    for kh in range(3):
        for kw in range(3):
            p = (kh % s) * s + (kw % s)
            dh, dw = kh // s, kw // s
            tap = y_scr[p, dh:dh + h_out, dw:dw + w_out, :].reshape(m, d)
            acc += jnp.dot(tap.astype(jnp.bfloat16), wc_ref[kh * 3 + kw],
                           preferred_element_type=jnp.float32)
    z = jnp.maximum(acc + bc_ref[...], 0.0).astype(jnp.bfloat16)

    # ---- conv_expand + bn_expand + shortcut + residual add + final ReLU ---
    out = jnp.dot(z, we_ref[...],
                  preferred_element_type=jnp.float32) + be_ref[...]
    # Shortcut input x[s*i, s*j] = x_pad[s*i+1, s*j+1] is also just a
    # contiguous window of the parity-decomposed input.
    ps = (1 % s) * s + (1 % s)
    d0 = 1 // s
    res = x_ref[0, ps, d0:d0 + h_out, d0:d0 + w_out, :].reshape(m, cin)
    if has_shortcut:
        out = out + jnp.dot(res.astype(jnp.bfloat16), ws_ref[...],
                            preferred_element_type=jnp.float32) + bs_ref[...]
    else:
        out = out + res                       # identity residual, f32 add
    o_ref[0] = jnp.maximum(out, 0.0).astype(o_ref.dtype)


# --------------------------------------------------------------------------
# Parameter preparation (BN folding, block-diagonal 3x3 weights)
# --------------------------------------------------------------------------
def _fold_bn(w2d, bn, eps):
    """Fold eval-mode BN scale into (K, Cout) weight columns; return bias."""
    scale = bn['gamma'] * jax.lax.rsqrt(bn['var'] + eps)
    w = (w2d * scale[None, :]).astype(jnp.bfloat16)
    b = (bn['beta'] - bn['mean'] * scale).reshape(1, -1).astype(jnp.float32)
    return w, b


def _blockdiag_conv_weights(w_conv, bn, groups, eps):
    """(D, Dg, 3, 3) grouped-conv weight -> (9, D, D) block-diag per-tap."""
    d = w_conv.shape[0]
    dg = d // groups
    wg = w_conv.reshape(groups, dg, dg, 3, 3)            # (g, co_g, ci_g, kh, kw)
    wg = jnp.transpose(wg, (3, 4, 0, 2, 1))               # (kh, kw, g, ci_g, co_g)
    scale = bn['gamma'] * jax.lax.rsqrt(bn['var'] + eps)
    wg = wg * scale.reshape(groups, dg)[None, None, :, None, :]
    bias = (bn['beta'] - bn['mean'] * scale).reshape(1, d).astype(jnp.float32)
    eye = jnp.eye(groups, dtype=wg.dtype)
    wbd = jnp.einsum('tgij,gh->tgihj', wg.reshape(9, groups, dg, dg), eye)
    return wbd.reshape(9, d, d).astype(jnp.bfloat16), bias


# --------------------------------------------------------------------------
# Full ResNeXtBottleneck forward
# --------------------------------------------------------------------------
def resnext_bottleneck_forward(x_nchw, p, *, stride, cardinality, eps=1e-5):
    N, Cin, H, W = x_nchw.shape
    D = p['w_reduce'].shape[0]
    Cout = p['w_expand'].shape[0]
    s = stride
    Ho = (H - 1) // s + 1
    Wo = (W - 1) // s + 1
    A = _cdiv(H + 2, s)
    B = _cdiv(W + 2, s)
    has_sc = 'w_shortcut' in p
    if not has_sc:
        assert s == 1 and Cin == Cout, "identity shortcut needs stride=1, Cin==Cout"

    # ---- fold eval-mode BN into the conv weights (one-time, outside kernel)
    w_r, b_r = _fold_bn(p['w_reduce'].reshape(D, Cin).T, p['bn_reduce'], eps)
    w_c, b_c = _blockdiag_conv_weights(p['w_conv'], p['bn'], cardinality, eps)
    w_e, b_e = _fold_bn(p['w_expand'].reshape(Cout, D).T, p['bn_expand'], eps)
    if has_sc:
        w_s, b_s = _fold_bn(p['w_shortcut'].reshape(Cout, Cin).T,
                            p['bn_shortcut'], eps)

    # ---- NCHW -> zero-padded, stride-parity NHWC (cheap XLA re-layout) -----
    x_nhwc = jnp.transpose(x_nchw, (0, 2, 3, 1))
    x_pad = jnp.pad(x_nhwc, ((0, 0), (1, A * s - H - 1), (1, B * s - W - 1),
                             (0, 0)))
    x_par = x_pad.reshape(N, A, s, B, s, Cin).transpose(0, 2, 4, 1, 3, 5)
    x_par = x_par.reshape(N, s * s, A, B, Cin)          # f32; bf16 cast in-kernel

    kernel = functools.partial(
        _bottleneck_kernel, stride=s, h_in=H, w_in=W, h_out=Ho, w_out=Wo,
        has_shortcut=has_sc)

    in_specs = [
        pl.BlockSpec((1, s * s, A, B, Cin), lambda n: (n, 0, 0, 0, 0)),
        pl.BlockSpec((Cin, D), lambda n: (0, 0)),
        pl.BlockSpec((1, D), lambda n: (0, 0)),
        pl.BlockSpec((9, D, D), lambda n: (0, 0, 0)),
        pl.BlockSpec((1, D), lambda n: (0, 0)),
        pl.BlockSpec((D, Cout), lambda n: (0, 0)),
        pl.BlockSpec((1, Cout), lambda n: (0, 0)),
    ]
    args = [x_par, w_r, b_r, w_c, b_c, w_e, b_e]
    if has_sc:
        in_specs += [pl.BlockSpec((Cin, Cout), lambda n: (0, 0)),
                     pl.BlockSpec((1, Cout), lambda n: (0, 0))]
        args += [w_s, b_s]

    flops = 2 * N * (H * W * Cin * D + Ho * Wo * 9 * D * D
                     + Ho * Wo * D * Cout
                     + (Ho * Wo * Cin * Cout if has_sc else 0))
    bytes_acc = int(x_par.size * 4 + w_r.size * 2 + w_c.size * 2 + w_e.size * 2
                    + (w_s.size * 2 if has_sc else 0)
                    + (b_r.size + b_c.size + b_e.size) * 4
                    + N * Ho * Wo * Cout * 2)

    out = pl.pallas_call(
        kernel,
        out_shape=jax.ShapeDtypeStruct((N, Ho * Wo, Cout), jnp.bfloat16),
        grid=(N,),
        in_specs=in_specs,
        out_specs=pl.BlockSpec((1, Ho * Wo, Cout), lambda n: (n, 0, 0)),
        scratch_shapes=[pltpu.VMEM((s * s, A, B, D), jnp.float32)],
        compiler_params=pltpu.CompilerParams(
            dimension_semantics=("parallel",),
            vmem_limit_bytes=32 * 1024 * 1024),
        cost_estimate=pl.CostEstimate(
            flops=int(flops), transcendentals=0, bytes_accessed=bytes_acc),
    )(*args)

    out = out.reshape(N, Ho, Wo, Cout)
    return jnp.transpose(out, (0, 3, 1, 2))              # NCHW, bf16


# --------------------------------------------------------------------------
# Pure-JAX reference (f32, XLA convs)
# --------------------------------------------------------------------------
def _reference(x, p, *, stride, cardinality, eps=1e-5):
    def conv(x, w, s, pad, groups=1):
        return jax.lax.conv_general_dilated(
            x, w, window_strides=(s, s), padding=((pad, pad), (pad, pad)),
            dimension_numbers=('NCHW', 'OIHW', 'NCHW'),
            feature_group_count=groups)

    def bn(x, st):
        sc = st['gamma'] / jnp.sqrt(st['var'] + eps)
        sh = st['beta'] - st['mean'] * sc
        return x * sc[None, :, None, None] + sh[None, :, None, None]

    y = jax.nn.relu(bn(conv(x, p['w_reduce'], 1, 0), p['bn_reduce']))
    y = jax.nn.relu(bn(conv(y, p['w_conv'], stride, 1, cardinality), p['bn']))
    y = bn(conv(y, p['w_expand'], 1, 0), p['bn_expand'])
    if 'w_shortcut' in p:
        r = bn(conv(x, p['w_shortcut'], stride, 0), p['bn_shortcut'])
    else:
        r = x
    return jax.nn.relu(y + r)


# --------------------------------------------------------------------------
if __name__ == "__main__":
    key = jax.random.PRNGKey(0)
    keys = jax.random.split(key, 10)

    # Small ResNeXtBottleneck config:
    #   in=64, out=128, stride=2, cardinality=4, base_width=32, widen_factor=2
    #   -> width_ratio = 1.0, D = 4 * 32 = 128, Dg = 32
    N, H, W = 2, 16, 16
    in_channels, out_channels = 64, 128
    stride, cardinality, base_width, widen_factor = 2, 4, 32, 2
    width_ratio = out_channels / (widen_factor * 64.0)
    D = cardinality * int(base_width * width_ratio)
    dg = D // cardinality

    def bn_params(k, c):
        k1, k2, k3, k4 = jax.random.split(k, 4)
        return dict(
            gamma=1.0 + 0.1 * jax.random.normal(k1, (c,), jnp.float32),
            beta=0.1 * jax.random.normal(k2, (c,), jnp.float32),
            mean=0.1 * jax.random.normal(k3, (c,), jnp.float32),
            var=jnp.abs(jax.random.normal(k4, (c,), jnp.float32)) + 0.5)

    x = jax.random.normal(keys[0], (N, in_channels, H, W), jnp.float32)
    p = dict(
        w_reduce=jax.random.normal(keys[1], (D, in_channels, 1, 1),
                                   jnp.float32) / np.sqrt(in_channels),
        bn_reduce=bn_params(keys[2], D),
        w_conv=jax.random.normal(keys[3], (D, dg, 3, 3),
                                 jnp.float32) / np.sqrt(9 * dg),
        bn=bn_params(keys[4], D),
        w_expand=jax.random.normal(keys[5], (out_channels, D, 1, 1),
                                   jnp.float32) / np.sqrt(D),
        bn_expand=bn_params(keys[6], out_channels),
    )
    if in_channels != out_channels:
        p['w_shortcut'] = jax.random.normal(
            keys[7], (out_channels, in_channels, 1, 1),
            jnp.float32) / np.sqrt(in_channels)
        p['bn_shortcut'] = bn_params(keys[8], out_channels)

    out = resnext_bottleneck_forward(x, p, stride=stride,
                                     cardinality=cardinality)
    out = jax.block_until_ready(out)

    ref = _reference(x, p, stride=stride, cardinality=cardinality)
    # bf16 MXU operands (f32 accumulation) across three chained convs and a
    # bf16 output store => tolerances looser than a pure-f32 path.
    np.testing.assert_allclose(np.asarray(out.astype(jnp.float32)),
                               np.asarray(ref), rtol=5e-2, atol=8e-2)
    print("KERNEL_OK")
</pallas_src>

<mosaic_0001>
module attributes {stable_mosaic.version = 11 : i64} {
  func.func @_bottleneck_kernel(%arg0: i32, %arg1: memref<1x4x9x9x64xf32, #tpu.memory_space<vmem>>, %arg2: memref<64x128xbf16, #tpu.memory_space<vmem>>, %arg3: memref<1x128xf32, #tpu.memory_space<vmem>>, %arg4: memref<9x128x128xbf16, #tpu.memory_space<vmem>>, %arg5: memref<1x128xf32, #tpu.memory_space<vmem>>, %arg6: memref<128x128xbf16, #tpu.memory_space<vmem>>, %arg7: memref<1x128xf32, #tpu.memory_space<vmem>>, %arg8: memref<64x128xbf16, #tpu.memory_space<vmem>>, %arg9: memref<1x128xf32, #tpu.memory_space<vmem>>, %arg10: memref<1x64x128xbf16, #tpu.memory_space<vmem>>, %arg11: memref<4x9x9x128xf32, #tpu.memory_space<vmem>>) attributes {dimension_semantics = [#tpu.dimension_semantics<parallel>], iteration_bounds = array<i64: 2>, scalar_prefetch = 0 : i64, scratch_operands = 1 : i64, tpu.core_type = #tpu.core_type<tc>, window_params = [{transform_indices = @transform_0, window_bounds = array<i64: 1, 4, 9, 9, 64>}, {pipeline_mode = #tpu.pipeline_mode<synchronous>, transform_indices = @transform_1, window_bounds = array<i64: 64, 128>}, {pipeline_mode = #tpu.pipeline_mode<synchronous>, transform_indices = @transform_2, window_bounds = array<i64: 1, 128>}, {pipeline_mode = #tpu.pipeline_mode<synchronous>, transform_indices = @transform_3, window_bounds = array<i64: 9, 128, 128>}, {pipeline_mode = #tpu.pipeline_mode<synchronous>, transform_indices = @transform_4, window_bounds = array<i64: 1, 128>}, {pipeline_mode = #tpu.pipeline_mode<synchronous>, transform_indices = @transform_5, window_bounds = array<i64: 128, 128>}, {pipeline_mode = #tpu.pipeline_mode<synchronous>, transform_indices = @transform_6, window_bounds = array<i64: 1, 128>}, {pipeline_mode = #tpu.pipeline_mode<synchronous>, transform_indices = @transform_7, window_bounds = array<i64: 64, 128>}, {pipeline_mode = #tpu.pipeline_mode<synchronous>, transform_indices = @transform_8, window_bounds = array<i64: 1, 128>}, {transform_indices = @transform_9, window_bounds = array<i64: 1, 64, 128>}]} {
    %cst = arith.constant 0.000000e+00 : f32
    %0 = vector.broadcast %cst : f32 to vector<4x9x9x128xf32>
    %c0 = arith.constant 0 : index
    %c0_0 = arith.constant 0 : index
    %c0_1 = arith.constant 0 : index
    %c0_2 = arith.constant 0 : index
    %1 = vector.load %arg11[%c0, %c0_0, %c0_1, %c0_2] : memref<4x9x9x128xf32, #tpu.memory_space<vmem>>, vector<4x9x9x128xf32>
    tpu.vector_store %arg11[%c0, %c0_0, %c0_1, %c0_2], %0 {strides = array<i32>} : memref<4x9x9x128xf32, #tpu.memory_space<vmem>>, vector<4x9x9x128xf32>,
    %c0_3 = arith.constant 0 : index
    %c0_4 = arith.constant 0 : index
    %2 = vector.load %arg2[%c0_3, %c0_4] : memref<64x128xbf16, #tpu.memory_space<vmem>>, vector<64x128xbf16>
    %c0_5 = arith.constant 0 : index
    %c0_6 = arith.constant 0 : index
    %3 = vector.load %arg3[%c0_5, %c0_6] : memref<1x128xf32, #tpu.memory_space<vmem>>, vector<1x128xf32>
    %c0_7 = arith.constant 0 : index
    %c0_8 = arith.constant 0 : index
    %c1 = arith.constant 1 : index
    %c1_9 = arith.constant 1 : index
    %c0_10 = arith.constant 0 : index
    %4 = vector.load %arg1[%c0_7, %c0_8, %c1, %c1_9, %c0_10] : memref<1x4x9x9x64xf32, #tpu.memory_space<vmem>>, vector<1x1x8x8x64xf32>
    %5 = vector.shape_cast %4 : vector<1x1x8x8x64xf32> to vector<8x8x64xf32>
    %6 = vector.shape_cast %5 : vector<8x8x64xf32> to vector<64x64xf32>
    %7 = arith.truncf %6 : vector<64x64xf32> to vector<64x64xbf16>
    %cst_11 = arith.constant dense<0.000000e+00> : vector<64x128xf32>
    %8 = tpu.matmul %7, %2, %cst_11 {dimension_numbers = #tpu.dot_dimension_numbers<[1], [0], [0], [1], [0, 0, 1, 1], [], []>} : vector<64x64xbf16>, vector<64x128xbf16>, vector<64x128xf32> -> vector<64x128xf32>
    %9 = vector.broadcast %3 : vector<1x128xf32> to vector<64x128xf32>
    %10 = arith.addf %8, %9 : vector<64x128xf32>
    %cst_12 = arith.constant 0.000000e+00 : f32
    %11 = vector.broadcast %cst_12 : f32 to vector<64x128xf32>
    %12 = arith.maximumf %10, %11 : vector<64x128xf32>
    %13 = vector.shape_cast %12 : vector<64x128xf32> to vector<8x8x128xf32>
    %c0_13 = arith.constant 0 : index
    %c1_14 = arith.constant 1 : index
    %c1_15 = arith.constant 1 : index
    %c0_16 = arith.constant 0 : index
    %14 = vector.load %arg11[%c0_13, %c1_14, %c1_15, %c0_16] : memref<4x9x9x128xf32, #tpu.memory_space<vmem>>, vector<1x8x8x128xf32>
    %15 = vector.shape_cast %14 : vector<1x8x8x128xf32> to vector<8x8x128xf32>
    %16 = vector.shape_cast %13 : vector<8x8x128xf32> to vector<1x8x8x128xf32>
    tpu.vector_store %arg11[%c0_13, %c1_14, %c1_15, %c0_16], %16 {strides = array<i32>} : memref<4x9x9x128xf32, #tpu.memory_space<vmem>>, vector<1x8x8x128xf32>,
    %c0_17 = arith.constant 0 : index
    %c1_18 = arith.constant 1 : index
    %c1_19 = arith.constant 1 : index
    %c0_20 = arith.constant 0 : index
    %c0_21 = arith.constant 0 : index
    %17 = vector.load %arg1[%c0_17, %c1_18, %c1_19, %c0_20, %c0_21] : memref<1x4x9x9x64xf32, #tpu.memory_space<vmem>>, vector<1x1x8x8x64xf32>
    %18 = vector.shape_cast %17 : vector<1x1x8x8x64xf32> to vector<8x8x64xf32>
    %19 = vector.shape_cast %18 : vector<8x8x64xf32> to vector<64x64xf32>
    %20 = arith.truncf %19 : vector<64x64xf32> to vector<64x64xbf16>
    %cst_22 = arith.constant dense<0.000000e+00> : vector<64x128xf32>
    %21 = tpu.matmul %20, %2, %cst_22 {dimension_numbers = #tpu.dot_dimension_numbers<[1], [0], [0], [1], [0, 0, 1, 1], [], []>} : vector<64x64xbf16>, vector<64x128xbf16>, vector<64x128xf32> -> vector<64x128xf32>
    %22 = vector.broadcast %3 : vector<1x128xf32> to vector<64x128xf32>
    %23 = arith.addf %21, %22 : vector<64x128xf32>
    %cst_23 = arith.constant 0.000000e+00 : f32
    %24 = vector.broadcast %cst_23 : f32 to vector<64x128xf32>
    %25 = arith.maximumf %23, %24 : vector<64x128xf32>
    %26 = vector.shape_cast %25 : vector<64x128xf32> to vector<8x8x128xf32>
    %c1_24 = arith.constant 1 : index
    %c1_25 = arith.constant 1 : index
    %c0_26 = arith.constant 0 : index
    %c0_27 = arith.constant 0 : index
    %27 = vector.load %arg11[%c1_24, %c1_25, %c0_26, %c0_27] : memref<4x9x9x128xf32, #tpu.memory_space<vmem>>, vector<1x8x8x128xf32>
    %28 = vector.shape_cast %27 : vector<1x8x8x128xf32> to vector<8x8x128xf32>
    %29 = vector.shape_cast %26 : vector<8x8x128xf32> to vector<1x8x8x128xf32>
    tpu.vector_store %arg11[%c1_24, %c1_25, %c0_26, %c0_27], %29 {strides = array<i32>} : memref<4x9x9x128xf32, #tpu.memory_space<vmem>>, vector<1x8x8x128xf32>,
    %c0_28 = arith.constant 0 : index
    %c2 = arith.constant 2 : index
    %c0_29 = arith.constant 0 : index
    %c1_30 = arith.constant 1 : index
    %c0_31 = arith.constant 0 : index
    %30 = vector.load %arg1[%c0_28, %c2, %c0_29, %c1_30, %c0_31] : memref<1x4x9x9x64xf32, #tpu.memory_space<vmem>>, vector<1x1x8x8x64xf32>
    %31 = vector.shape_cast %30 : vector<1x1x8x8x64xf32> to vector<8x8x64xf32>
    %32 = vector.shape_cast %31 : vector<8x8x64xf32> to vector<64x64xf32>
    %33 = arith.truncf %32 : vector<64x64xf32> to vector<64x64xbf16>
    %cst_32 = arith.constant dense<0.000000e+00> : vector<64x128xf32>
    %34 = tpu.matmul %33, %2, %cst_32 {dimension_numbers = #tpu.dot_dimension_numbers<[1], [0], [0], [1], [0, 0, 1, 1], [], []>} : vector<64x64xbf16>, vector<64x128xbf16>, vector<64x128xf32> -> vector<64x128xf32>
    %35 = vector.broadcast %3 : vector<1x128xf32> to vector<64x128xf32>
    %36 = arith.addf %34, %35 : vector<64x128xf32>
    %cst_33 = arith.constant 0.000000e+00 : f32
    %37 = vector.broadcast %cst_33 : f32 to vector<64x128xf32>
    %38 = arith.maximumf %36, %37 : vector<64x128xf32>
    %39 = vector.shape_cast %38 : vector<64x128xf32> to vector<8x8x128xf32>
    %c2_34 = arith.constant 2 : index
    %c0_35 = arith.constant 0 : index
    %c1_36 = arith.constant 1 : index
    %c0_37 = arith.constant 0 : index
    %40 = vector.load %arg11[%c2_34, %c0_35, %c1_36, %c0_37] : memref<4x9x9x128xf32, #tpu.memory_space<vmem>>, vector<1x8x8x128xf32>
    %41 = vector.shape_cast %40 : vector<1x8x8x128xf32> to vector<8x8x128xf32>
    %42 = vector.shape_cast %39 : vector<8x8x128xf32> to vector<1x8x8x128xf32>
    tpu.vector_store %arg11[%c2_34, %c0_35, %c1_36, %c0_37], %42 {strides = array<i32>} : memref<4x9x9x128xf32, #tpu.memory_space<vmem>>, vector<1x8x8x128xf32>,
    %c0_38 = arith.constant 0 : index
    %c3 = arith.constant 3 : index
    %c0_39 = arith.constant 0 : index
    %c0_40 = arith.constant 0 : index
    %c0_41 = arith.constant 0 : index
    %43 = vector.load %arg1[%c0_38, %c3, %c0_39, %c0_40, %c0_41] : memref<1x4x9x9x64xf32, #tpu.memory_space<vmem>>, vector<1x1x8x8x64xf32>
    %44 = vector.shape_cast %43 : vector<1x1x8x8x64xf32> to vector<8x8x64xf32>
    %45 = vector.shape_cast %44 : vector<8x8x64xf32> to vector<64x64xf32>
    %46 = arith.truncf %45 : vector<64x64xf32> to vector<64x64xbf16>
    %cst_42 = arith.constant dense<0.000000e+00> : vector<64x128xf32>
    %47 = tpu.matmul %46, %2, %cst_42 {dimension_numbers = #tpu.dot_dimension_numbers<[1], [0], [0], [1], [0, 0, 1, 1], [], []>} : vector<64x64xbf16>, vector<64x128xbf16>, vector<64x128xf32> -> vector<64x128xf32>
    %48 = vector.broadcast %3 : vector<1x128xf32> to vector<64x128xf32>
    %49 = arith.addf %47, %48 : vector<64x128xf32>
    %cst_43 = arith.constant 0.000000e+00 : f32
    %50 = vector.broadcast %cst_43 : f32 to vector<64x128xf32>
    %51 = arith.maximumf %49, %50 : vector<64x128xf32>
    %52 = vector.shape_cast %51 : vector<64x128xf32> to vector<8x8x128xf32>
    %c3_44 = arith.constant 3 : index
    %c0_45 = arith.constant 0 : index
    %c0_46 = arith.constant 0 : index
    %c0_47 = arith.constant 0 : index
    %53 = vector.load %arg11[%c3_44, %c0_45, %c0_46, %c0_47] : memref<4x9x9x128xf32, #tpu.memory_space<vmem>>, vector<1x8x8x128xf32>
    %54 = vector.shape_cast %53 : vector<1x8x8x128xf32> to vector<8x8x128xf32>
    %55 = vector.shape_cast %52 : vector<8x8x128xf32> to vector<1x8x8x128xf32>
    tpu.vector_store %arg11[%c3_44, %c0_45, %c0_46, %c0_47], %55 {strides = array<i32>} : memref<4x9x9x128xf32, #tpu.memory_space<vmem>>, vector<1x8x8x128xf32>,
    %cst_48 = arith.constant 0.000000e+00 : f32
    %56 = vector.broadcast %cst_48 : f32 to vector<64x128xf32>
    %c0_49 = arith.constant 0 : index
    %c0_50 = arith.constant 0 : index
    %c0_51 = arith.constant 0 : index
    %c0_52 = arith.constant 0 : index
    %57 = vector.load %arg11[%c0_49, %c0_50, %c0_51, %c0_52] : memref<4x9x9x128xf32, #tpu.memory_space<vmem>>, vector<1x8x8x128xf32>
    %58 = vector.shape_cast %57 : vector<1x8x8x128xf32> to vector<8x8x128xf32>
    %59 = vector.shape_cast %58 : vector<8x8x128xf32> to vector<64x128xf32>
    %60 = arith.truncf %59 : vector<64x128xf32> to vector<64x128xbf16>
    %c0_53 = arith.constant 0 : index
    %c0_54 = arith.constant 0 : index
    %c0_55 = arith.constant 0 : index
    %61 = vector.load %arg4[%c0_53, %c0_54, %c0_55] : memref<9x128x128xbf16, #tpu.memory_space<vmem>>, vector<1x128x128xbf16>
    %62 = vector.shape_cast %61 : vector<1x128x128xbf16> to vector<128x128xbf16>
    %cst_56 = arith.constant dense<0.000000e+00> : vector<64x128xf32>
    %63 = tpu.matmul %60, %62, %cst_56 {dimension_numbers = #tpu.dot_dimension_numbers<[1], [0], [0], [1], [0, 0, 1, 1], [], []>} : vector<64x128xbf16>, vector<128x128xbf16>, vector<64x128xf32> -> vector<64x128xf32>
    %64 = arith.addf %56, %63 : vector<64x128xf32>
    %c1_57 = arith.constant 1 : index
    %c0_58 = arith.constant 0 : index
    %c0_59 = arith.constant 0 : index
    %c0_60 = arith.constant 0 : index
    %65 = vector.load %arg11[%c1_57, %c0_58, %c0_59, %c0_60] : memref<4x9x9x128xf32, #tpu.memory_space<vmem>>, vector<1x8x8x128xf32>
    %66 = vector.shape_cast %65 : vector<1x8x8x128xf32> to vector<8x8x128xf32>
    %67 = vector.shape_cast %66 : vector<8x8x128xf32> to vector<64x128xf32>
    %68 = arith.truncf %67 : vector<64x128xf32> to vector<64x128xbf16>
    %c1_61 = arith.constant 1 : index
    %c0_62 = arith.constant 0 : index
    %c0_63 = arith.constant 0 : index
    %69 = vector.load %arg4[%c1_61, %c0_62, %c0_63] : memref<9x128x128xbf16, #tpu.memory_space<vmem>>, vector<1x128x128xbf16>
    %70 = vector.shape_cast %69 : vector<1x128x128xbf16> to vector<128x128xbf16>
    %cst_64 = arith.constant dense<0.000000e+00> : vector<64x128xf32>
    %71 = tpu.matmul %68, %70, %cst_64 {dimension_numbers = #tpu.dot_dimension_numbers<[1], [0], [0], [1], [0, 0, 1, 1], [], []>} : vector<64x128xbf16>, vector<128x128xbf16>, vector<64x128xf32> -> vector<64x128xf32>
    %72 = arith.addf %64, %71 : vector<64x128xf32>
    %c0_65 = arith.constant 0 : index
    %c0_66 = arith.constant 0 : index
    %c1_67 = arith.constant 1 : index
    %c0_68 = arith.constant 0 : index
    %73 = vector.load %arg11[%c0_65, %c0_66, %c1_67, %c0_68] : memref<4x9x9x128xf32, #tpu.memory_space<vmem>>, vector<1x8x8x128xf32>
    %74 = vector.shape_cast %73 : vector<1x8x8x128xf32> to vector<8x8x128xf32>
    %75 = vector.shape_cast %74 : vector<8x8x128xf32> to vector<64x128xf32>
    %76 = arith.truncf %75 : vector<64x128xf32> to vector<64x128xbf16>
    %c2_69 = arith.constant 2 : index
    %c0_70 = arith.constant 0 : index
    %c0_71 = arith.constant 0 : index
    %77 = vector.load %arg4[%c2_69, %c0_70, %c0_71] : memref<9x128x128xbf16, #tpu.memory_space<vmem>>, vector<1x128x128xbf16>
    %78 = vector.shape_cast %77 : vector<1x128x128xbf16> to vector<128x128xbf16>
    %cst_72 = arith.constant dense<0.000000e+00> : vector<64x128xf32>
    %79 = tpu.matmul %76, %78, %cst_72 {dimension_numbers = #tpu.dot_dimension_numbers<[1], [0], [0], [1], [0, 0, 1, 1], [], []>} : vector<64x128xbf16>, vector<128x128xbf16>, vector<64x128xf32> -> vector<64x128xf32>
    %80 = arith.addf %72, %79 : vector<64x128xf32>
    %c2_73 = arith.constant 2 : index
    %c0_74 = arith.constant 0 : index
    %c0_75 = arith.constant 0 : index
    %c0_76 = arith.constant 0 : index
    %81 = vector.load %arg11[%c2_73, %c0_74, %c0_75, %c0_76] : memref<4x9x9x128xf32, #tpu.memory_space<vmem>>, vector<1x8x8x128xf32>
    %82 = vector.shape_cast %81 : vector<1x8x8x128xf32> to vector<8x8x128xf32>
    %83 = vector.shape_cast %82 : vector<8x8x128xf32> to vector<64x128xf32>
    %84 = arith.truncf %83 : vector<64x128xf32> to vector<64x128xbf16>
    %c3_77 = arith.constant 3 : index
    %c0_78 = arith.constant 0 : index
    %c0_79 = arith.constant 0 : index
    %85 = vector.load %arg4[%c3_77, %c0_78, %c0_79] : memref<9x128x128xbf16, #tpu.memory_space<vmem>>, vector<1x128x128xbf16>
    %86 = vector.shape_cast %85 : vector<1x128x128xbf16> to vector<128x128xbf16>
    %cst_80 = arith.constant dense<0.000000e+00> : vector<64x128xf32>
    %87 = tpu.matmul %84, %86, %cst_80 {dimension_numbers = #tpu.dot_dimension_numbers<[1], [0], [0], [1], [0, 0, 1, 1], [], []>} : vector<64x128xbf16>, vector<128x128xbf16>, vector<64x128xf32> -> vector<64x128xf32>
    %88 = arith.addf %80, %87 : vector<64x128xf32>
    %c3_81 = arith.constant 3 : index
    %c0_82 = arith.constant 0 : index
    %c0_83 = arith.constant 0 : index
    %c0_84 = arith.constant 0 : index
    %89 = vector.load %arg11[%c3_81, %c0_82, %c0_83, %c0_84] : memref<4x9x9x128xf32, #tpu.memory_space<vmem>>, vector<1x8x8x128xf32>
    %90 = vector.shape_cast %89 : vector<1x8x8x128xf32> to vector<8x8x128xf32>
    %91 = vector.shape_cast %90 : vector<8x8x128xf32> to vector<64x128xf32>
    %92 = arith.truncf %91 : vector<64x128xf32> to vector<64x128xbf16>
    %c4 = arith.constant 4 : index
    %c0_85 = arith.constant 0 : index
    %c0_86 = arith.constant 0 : index
    %93 = vector.load %arg4[%c4, %c0_85, %c0_86] : memref<9x128x128xbf16, #tpu.memory_space<vmem>>, vector<1x128x128xbf16>
    %94 = vector.shape_cast %93 : vector<1x128x128xbf16> to vector<128x128xbf16>
    %cst_87 = arith.constant dense<0.000000e+00> : vector<64x128xf32>
    %95 = tpu.matmul %92, %94, %cst_87 {dimension_numbers = #tpu.dot_dimension_numbers<[1], [0], [0], [1], [0, 0, 1, 1], [], []>} : vector<64x128xbf16>, vector<128x128xbf16>, vector<64x128xf32> -> vector<64x128xf32>
    %96 = arith.addf %88, %95 : vector<64x128xf32>
    %c2_88 = arith.constant 2 : index
    %c0_89 = arith.constant 0 : index
    %c1_90 = arith.constant 1 : index
    %c0_91 = arith.constant 0 : index
    %97 = vector.load %arg11[%c2_88, %c0_89, %c1_90, %c0_91] : memref<4x9x9x128xf32, #tpu.memory_space<vmem>>, vector<1x8x8x128xf32>
    %98 = vector.shape_cast %97 : vector<1x8x8x128xf32> to vector<8x8x128xf32>
    %99 = vector.shape_cast %98 : vector<8x8x128xf32> to vector<64x128xf32>
    %100 = arith.truncf %99 : vector<64x128xf32> to vector<64x128xbf16>
    %c5 = arith.constant 5 : index
    %c0_92 = arith.constant 0 : index
    %c0_93 = arith.constant 0 : index
    %101 = vector.load %arg4[%c5, %c0_92, %c0_93] : memref<9x128x128xbf16, #tpu.memory_space<vmem>>, vector<1x128x128xbf16>
    %102 = vector.shape_cast %101 : vector<1x128x128xbf16> to vector<128x128xbf16>
    %cst_94 = arith.constant dense<0.000000e+00> : vector<64x128xf32>
    %103 = tpu.matmul %100, %102, %cst_94 {dimension_numbers = #tpu.dot_dimension_numbers<[1], [0], [0], [1], [0, 0, 1, 1], [], []>} : vector<64x128xbf16>, vector<128x128xbf16>, vector<64x128xf32> -> vector<64x128xf32>
    %104 = arith.addf %96, %103 : vector<64x128xf32>
    %c0_95 = arith.constant 0 : index
    %c1_96 = arith.constant 1 : index
    %c0_97 = arith.constant 0 : index
    %c0_98 = arith.constant 0 : index
    %105 = vector.load %arg11[%c0_95, %c1_96, %c0_97, %c0_98] : memref<4x9x9x128xf32, #tpu.memory_space<vmem>>, vector<1x8x8x128xf32>
    %106 = vector.shape_cast %105 : vector<1x8x8x128xf32> to vector<8x8x128xf32>
    %107 = vector.shape_cast %106 : vector<8x8x128xf32> to vector<64x128xf32>
    %108 = arith.truncf %107 : vector<64x128xf32> to vector<64x128xbf16>
    %c6 = arith.constant 6 : index
    %c0_99 = arith.constant 0 : index
    %c0_100 = arith.constant 0 : index
    %109 = vector.load %arg4[%c6, %c0_99, %c0_100] : memref<9x128x128xbf16, #tpu.memory_space<vmem>>, vector<1x128x128xbf16>
    %110 = vector.shape_cast %109 : vector<1x128x128xbf16> to vector<128x128xbf16>
    %cst_101 = arith.constant dense<0.000000e+00> : vector<64x128xf32>
    %111 = tpu.matmul %108, %110, %cst_101 {dimension_numbers = #tpu.dot_dimension_numbers<[1], [0], [0], [1], [0, 0, 1, 1], [], []>} : vector<64x128xbf16>, vector<128x128xbf16>, vector<64x128xf32> -> vector<64x128xf32>
    %112 = arith.addf %104, %111 : vector<64x128xf32>
    %c1_102 = arith.constant 1 : index
    %c1_103 = arith.constant 1 : index
    %c0_104 = arith.constant 0 : index
    %c0_105 = arith.constant 0 : index
    %113 = vector.load %arg11[%c1_102, %c1_103, %c0_104, %c0_105] : memref<4x9x9x128xf32, #tpu.memory_space<vmem>>, vector<1x8x8x128xf32>
    %114 = vector.shape_cast %113 : vector<1x8x8x128xf32> to vector<8x8x128xf32>
    %115 = vector.shape_cast %114 : vector<8x8x128xf32> to vector<64x128xf32>
    %116 = arith.truncf %115 : vector<64x128xf32> to vector<64x128xbf16>
    %c7 = arith.constant 7 : index
    %c0_106 = arith.constant 0 : index
    %c0_107 = arith.constant 0 : index
    %117 = vector.load %arg4[%c7, %c0_106, %c0_107] : memref<9x128x128xbf16, #tpu.memory_space<vmem>>, vector<1x128x128xbf16>
    %118 = vector.shape_cast %117 : vector<1x128x128xbf16> to vector<128x128xbf16>
    %cst_108 = arith.constant dense<0.000000e+00> : vector<64x128xf32>
    %119 = tpu.matmul %116, %118, %cst_108 {dimension_numbers = #tpu.dot_dimension_numbers<[1], [0], [0], [1], [0, 0, 1, 1], [], []>} : vector<64x128xbf16>, vector<128x128xbf16>, vector<64x128xf32> -> vector<64x128xf32>
    %120 = arith.addf %112, %119 : vector<64x128xf32>
    %c0_109 = arith.constant 0 : index
    %c1_110 = arith.constant 1 : index
    %c1_111 = arith.constant 1 : index
    %c0_112 = arith.constant 0 : index
    %121 = vector.load %arg11[%c0_109, %c1_110, %c1_111, %c0_112] : memref<4x9x9x128xf32, #tpu.memory_space<vmem>>, vector<1x8x8x128xf32>
    %122 = vector.shape_cast %121 : vector<1x8x8x128xf32> to vector<8x8x128xf32>
    %123 = vector.shape_cast %122 : vector<8x8x128xf32> to vector<64x128xf32>
    %124 = arith.truncf %123 : vector<64x128xf32> to vector<64x128xbf16>
    %c8 = arith.constant 8 : index
    %c0_113 = arith.constant 0 : index
    %c0_114 = arith.constant 0 : index
    %125 = vector.load %arg4[%c8, %c0_113, %c0_114] : memref<9x128x128xbf16, #tpu.memory_space<vmem>>, vector<1x128x128xbf16>
    %126 = vector.shape_cast %125 : vector<1x128x128xbf16> to vector<128x128xbf16>
    %cst_115 = arith.constant dense<0.000000e+00> : vector<64x128xf32>
    %127 = tpu.matmul %124, %126, %cst_115 {dimension_numbers = #tpu.dot_dimension_numbers<[1], [0], [0], [1], [0, 0, 1, 1], [], []>} : vector<64x128xbf16>, vector<128x128xbf16>, vector<64x128xf32> -> vector<64x128xf32>
    %128 = arith.addf %120, %127 : vector<64x128xf32>
    %c0_116 = arith.constant 0 : index
    %c0_117 = arith.constant 0 : index
    %129 = vector.load %arg5[%c0_116, %c0_117] : memref<1x128xf32, #tpu.memory_space<vmem>>, vector<1x128xf32>
    %130 = vector.broadcast %129 : vector<1x128xf32> to vector<64x128xf32>
    %131 = arith.addf %128, %130 : vector<64x128xf32>
    %cst_118 = arith.constant 0.000000e+00 : f32
    %132 = vector.broadcast %cst_118 : f32 to vector<64x128xf32>
    %133 = arith.maximumf %131, %132 : vector<64x128xf32>
    %134 = arith.truncf %133 : vector<64x128xf32> to vector<64x128xbf16>
    %c0_119 = arith.constant 0 : index
    %c0_120 = arith.constant 0 : index
    %135 = vector.load %arg6[%c0_119, %c0_120] : memref<128x128xbf16, #tpu.memory_space<vmem>>, vector<128x128xbf16>
    %cst_121 = arith.constant dense<0.000000e+00> : vector<64x128xf32>
    %136 = tpu.matmul %134, %135, %cst_121 {dimension_numbers = #tpu.dot_dimension_numbers<[1], [0], [0], [1], [0, 0, 1, 1], [], []>} : vector<64x128xbf16>, vector<128x128xbf16>, vector<64x128xf32> -> vector<64x128xf32>
    %c0_122 = arith.constant 0 : index
    %c0_123 = arith.constant 0 : index
    %137 = vector.load %arg7[%c0_122, %c0_123] : memref<1x128xf32, #tpu.memory_space<vmem>>, vector<1x128xf32>
    %138 = vector.broadcast %137 : vector<1x128xf32> to vector<64x128xf32>
    %139 = arith.addf %136, %138 : vector<64x128xf32>
    %c0_124 = arith.constant 0 : index
    %c3_125 = arith.constant 3 : index
    %c0_126 = arith.constant 0 : index
    %c0_127 = arith.constant 0 : index
    %c0_128 = arith.constant 0 : index
    %140 = vector.load %arg1[%c0_124, %c3_125, %c0_126, %c0_127, %c0_128] : memref<1x4x9x9x64xf32, #tpu.memory_space<vmem>>, vector<1x1x8x8x64xf32>
    %141 = vector.shape_cast %140 : vector<1x1x8x8x64xf32> to vector<8x8x64xf32>
    %142 = vector.shape_cast %141 : vector<8x8x64xf32> to vector<64x64xf32>
    %143 = arith.truncf %142 : vector<64x64xf32> to vector<64x64xbf16>
    %c0_129 = arith.constant 0 : index
    %c0_130 = arith.constant 0 : index
    %144 = vector.load %arg8[%c0_129, %c0_130] : memref<64x128xbf16, #tpu.memory_space<vmem>>, vector<64x128xbf16>
    %cst_131 = arith.constant dense<0.000000e+00> : vector<64x128xf32>
    %145 = tpu.matmul %143, %144, %cst_131 {dimension_numbers = #tpu.dot_dimension_numbers<[1], [0], [0], [1], [0, 0, 1, 1], [], []>} : vector<64x64xbf16>, vector<64x128xbf16>, vector<64x128xf32> -> vector<64x128xf32>
    %146 = arith.addf %139, %145 : vector<64x128xf32>
    %c0_132 = arith.constant 0 : index
    %c0_133 = arith.constant 0 : index
    %147 = vector.load %arg9[%c0_132, %c0_133] : memref<1x128xf32, #tpu.memory_space<vmem>>, vector<1x128xf32>
    %148 = vector.broadcast %147 : vector<1x128xf32> to vector<64x128xf32>
    %149 = arith.addf %146, %148 : vector<64x128xf32>
    %cst_134 = arith.constant 0.000000e+00 : f32
    %150 = vector.broadcast %cst_134 : f32 to vector<64x128xf32>
    %151 = arith.maximumf %149, %150 : vector<64x128xf32>
    %152 = arith.truncf %151 : vector<64x128xf32> to vector<64x128xbf16>
    %c0_135 = arith.constant 0 : index
    %c0_136 = arith.constant 0 : index
    %c0_137 = arith.constant 0 : index
    %153 = vector.load %arg10[%c0_135, %c0_136, %c0_137] : memref<1x64x128xbf16, #tpu.memory_space<vmem>>, vector<1x64x128xbf16>
    %154 = vector.shape_cast %153 : vector<1x64x128xbf16> to vector<64x128xbf16>
    %155 = vector.shape_cast %152 : vector<64x128xbf16> to vector<1x64x128xbf16>
    tpu.vector_store %arg10[%c0_135, %c0_136, %c0_137], %155 {strides = array<i32>} : memref<1x64x128xbf16, #tpu.memory_space<vmem>>, vector<1x64x128xbf16>,
    return
  }
  func.func @transform_0(%arg0: i32) -> (i32, i32, i32, i32, i32) {
    %c0_i32 = arith.constant 0 : i32
    %c0_i32_0 = arith.constant 0 : i32
    %c0_i32_1 = arith.constant 0 : i32
    %c0_i32_2 = arith.constant 0 : i32
    %c0_i32_3 = arith.constant 0 : i32
    return %arg0, %c0_i32, %c0_i32_0, %c0_i32_1, %c0_i32_2 : i32, i32, i32, i32, i32
  }
  func.func @transform_1(%arg0: i32) -> (i32, i32) {
    %c0_i32 = arith.constant 0 : i32
    %c0_i32_0 = arith.constant 0 : i32
    %c0_i32_1 = arith.constant 0 : i32
    return %c0_i32, %c0_i32_0 : i32, i32
  }
  func.func @transform_2(%arg0: i32) -> (i32, i32) {
    %c0_i32 = arith.constant 0 : i32
    %c0_i32_0 = arith.constant 0 : i32
    %c0_i32_1 = arith.constant 0 : i32
    return %c0_i32, %c0_i32_0 : i32, i32
  }
  func.func @transform_3(%arg0: i32) -> (i32, i32, i32) {
    %c0_i32 = arith.constant 0 : i32
    %c0_i32_0 = arith.constant 0 : i32
    %c0_i32_1 = arith.constant 0 : i32
    %c0_i32_2 = arith.constant 0 : i32
    return %c0_i32, %c0_i32_0, %c0_i32_1 : i32, i32, i32
  }
  func.func @transform_4(%arg0: i32) -> (i32, i32) {
    %c0_i32 = arith.constant 0 : i32
    %c0_i32_0 = arith.constant 0 : i32
    %c0_i32_1 = arith.constant 0 : i32
    return %c0_i32, %c0_i32_0 : i32, i32
  }
  func.func @transform_5(%arg0: i32) -> (i32, i32) {
    %c0_i32 = arith.constant 0 : i32
    %c0_i32_0 = arith.constant 0 : i32
    %c0_i32_1 = arith.constant 0 : i32
    return %c0_i32, %c0_i32_0 : i32, i32
  }
  func.func @transform_6(%arg0: i32) -> (i32, i32) {
    %c0_i32 = arith.constant 0 : i32
    %c0_i32_0 = arith.constant 0 : i32
    %c0_i32_1 = arith.constant 0 : i32
    return %c0_i32, %c0_i32_0 : i32, i32
  }
  func.func @transform_7(%arg0: i32) -> (i32, i32) {
    %c0_i32 = arith.constant 0 : i32
    %c0_i32_0 = arith.constant 0 : i32
    %c0_i32_1 = arith.constant 0 : i32
    return %c0_i32, %c0_i32_0 : i32, i32
  }
  func.func @transform_8(%arg0: i32) -> (i32, i32) {
    %c0_i32 = arith.constant 0 : i32
    %c0_i32_0 = arith.constant 0 : i32
    %c0_i32_1 = arith.constant 0 : i32
    return %c0_i32, %c0_i32_0 : i32, i32
  }
  func.func @transform_9(%arg0: i32) -> (i32, i32, i32) {
    %c0_i32 = arith.constant 0 : i32
    %c0_i32_0 = arith.constant 0 : i32
    %c0_i32_1 = arith.constant 0 : i32
    return %arg0, %c0_i32, %c0_i32_0 : i32, i32, i32
  }
}

</mosaic_0001>

<llo_original>
// kernel: tpu_custom_call.1
$region0: #{tpu_custom_call.1}
  #allocation0 [shape = 'u32[]', space=smem, size = 0x4, offset = 0x4, fixed_abs, tag = 'smem constant byte address 0x4 - core index']
  #allocation1 [shape = 'u32[144,128]{1,0:T(1,128)}', space=vmem, size = 0x12000, scoped, tag = 'internal scratch']
  #allocation2 [shape = 'f32[4,9,9,128]{3,2,1,0:T(8,128)}', space=vmem, size = 0x48000, scoped, tag = 'scratch operand']
  %s0 = inlined_call_operand.vmem [shape: f32[2,4,9,9,64], index: 0, kind: input, shape index: {}]
  %s1 = inlined_call_operand.vmem [shape: bf16[64,128], index: 1, kind: input, shape index: {}]
  %s2 = inlined_call_operand.vmem [shape: f32[1,128], index: 2, kind: input, shape index: {}]
  %s3 = inlined_call_operand.vmem [shape: bf16[9,128,128], index: 3, kind: input, shape index: {}]
  %s4 = inlined_call_operand.vmem [shape: f32[1,128], index: 4, kind: input, shape index: {}]
  %s5 = inlined_call_operand.vmem [shape: bf16[128,128], index: 5, kind: input, shape index: {}]
  %s6 = inlined_call_operand.vmem [shape: f32[1,128], index: 6, kind: input, shape index: {}]
  %s7 = inlined_call_operand.vmem [shape: bf16[64,128], index: 7, kind: input, shape index: {}]
  %s8 = inlined_call_operand.vmem [shape: f32[1,128], index: 8, kind: input, shape index: {}]
  %s9 = inlined_call_operand.hbm [shape: bf16[2,64,128], index: 9, kind: output, shape index: {}]
  %s10 = sld [smem:[#allocation0]]
  $region69: #{tpu_custom_call.1} parent=0
    _
  %s12 = ssub.s32 1, %s10
  %s13 = scalar_select 0, %s12, %s10
  $region1: #{tpu_custom_call.1} parent=0
    #allocation3 [shape = 'u8[32768]{0}', space=vmem, size = 0x8000, scoped, tag = 'output window, operand 0']
    #allocation4 [shape = 's32[2]{0}', space=sflag, size = 0x8, scoped, tag = 'scoped memory for tpu_custom_call.1']
    %14 = vsyncpa [#allocation4], 0
    %s15 = scalar_lea.sflag [#allocation4], 1
    %16 = vsyncpa %s15, 0
    loop: start=0, step=1, limit=4
    $region2: #{tpu_custom_call.1} parent=1 // loop_pre_header
      _
    $region3: #{tpu_custom_call.1} parent=1 // loop_header
      %s18 = sphi 0, %s22
      %p19 = scmp.ge.s32.totalorder %s18, 4
      %s28 = sphi 0, %s30
      %s31 = sphi 0, %s28
      %s32 = sphi 0, %s31
      %s48 = sphi 0, %s32
      %s52 = sphi 0, %s52
      %s54 = sphi 0, %s52
      %s55 = sphi 0, %s54
      %s69 = sphi 0, %s55
      %s73 = sphi 0, %s73
      %s75 = sphi 0, %s73
      %s76 = sphi 0, %s75
      %s90 = sphi 0, %s76
      %s94 = sphi 0, %s94
      %s96 = sphi 0, %s94
      %s97 = sphi 0, %s96
      %s111 = sphi 0, %s97
      %s115 = sphi 0, %s115
      %s117 = sphi 0, %s115
      %s118 = sphi 0, %s117
      %s132 = sphi 0, %s118
      %s136 = sphi 0, %s136
      %s138 = sphi 0, %s136
      %s139 = sphi 0, %s138
      %s153 = sphi 0, %s139
      %s157 = sphi 0, %s157
      %s159 = sphi 0, %s157
      %s160 = sphi 0, %s159
      %s174 = sphi 0, %s160
      %s178 = sphi 0, %s178
      %s180 = sphi 0, %s178
      %s181 = sphi 0, %s180
      %s195 = sphi 0, %s181
      %s199 = sphi 0, %s199
      %s201 = sphi 0, %s199
      %s202 = sphi 0, %s201
      %s216 = sphi 0, %s202
      %s222 = sphi 0, %s224
      %s225 = sphi 0, %s222
      %s226 = sphi 0, %s225
      %s242 = sphi 0, %s226
    $region4: #{tpu_custom_call.1} parent=1 // loop_header_branch
      %21 = sbr.rel (%p19) target = $region8
    $region5: #{tpu_custom_call.1} parent=1 // loop_body
      %s23 = ssub.s32 %s18, 1
      %s24 = ssub.s32 %s18, 2
      %s25 = sadd.s32 %s18, 1
      %s26 = ssub.s32 %s18, %s25
      %p27 = scmp.eq.s32.totalorder %s26, 0
      %s29 = sadd.s32 %s28, 1
      %s30 = scalar_select %p27, %s28, %s29
      %p33 = pneg %p27
      %p34 = scmp.eq.s32.totalorder %s18, 1
      %p35 = por %p33, %p34
      %p36 = scmp.ne.s32.totalorder %s28, %s31
      %p37 = scmp.eq.s32.totalorder %s18, 0
      %p38 = por %p36, %p37
      %p39 = scmp.ne.s32.totalorder %s28, %s31
      %p40 = scmp.eq.s32.totalorder %s23, 1
      %p41 = por %p39, %p40
      %p42 = scmp.ne.s32.totalorder %s31, %s32
      %p43 = scmp.eq.s32.totalorder %s23, 0
      %p44 = por %p42, %p43
      %p45 = scmp.ne.s32.totalorder %s31, %s32
      %p46 = scmp.eq.s32.totalorder %s24, 1
      %p47 = por %p45, %p46
      %p49 = scmp.ne.s32.totalorder %s32, %s48
      %p50 = scmp.eq.s32.totalorder %s24, 0
      %p51 = por %p49, %p50
      %s53 = sadd.s32 %s52, 1
      %p56 = scmp.eq.s32.totalorder %s18, 1
      %p57 = scmp.ne.s32.totalorder %s52, %s54
      %p58 = scmp.eq.s32.totalorder %s18, 0
      %p59 = por %p57, %p58
      %p60 = scmp.ne.s32.totalorder %s52, %s54
      %p61 = scmp.eq.s32.totalorder %s23, 1
      %p62 = por %p60, %p61
      %p63 = scmp.ne.s32.totalorder %s54, %s55
      %p64 = scmp.eq.s32.totalorder %s23, 0
      %p65 = por %p63, %p64
      %p66 = scmp.ne.s32.totalorder %s54, %s55
      %p67 = scmp.eq.s32.totalorder %s24, 1
      %p68 = por %p66, %p67
      %p70 = scmp.ne.s32.totalorder %s55, %s69
      %p71 = scmp.eq.s32.totalorder %s24, 0
      %p72 = por %p70, %p71
      %s74 = sadd.s32 %s73, 1
      %p77 = scmp.eq.s32.totalorder %s18, 1
      %p78 = scmp.ne.s32.totalorder %s73, %s75
      %p79 = scmp.eq.s32.totalorder %s18, 0
      %p80 = por %p78, %p79
      %p81 = scmp.ne.s32.totalorder %s73, %s75
      %p82 = scmp.eq.s32.totalorder %s23, 1
      %p83 = por %p81, %p82
      %p84 = scmp.ne.s32.totalorder %s75, %s76
      %p85 = scmp.eq.s32.totalorder %s23, 0
      %p86 = por %p84, %p85
      %p87 = scmp.ne.s32.totalorder %s75, %s76
      %p88 = scmp.eq.s32.totalorder %s24, 1
      %p89 = por %p87, %p88
      %p91 = scmp.ne.s32.totalorder %s76, %s90
      %p92 = scmp.eq.s32.totalorder %s24, 0
      %p93 = por %p91, %p92
      %s95 = sadd.s32 %s94, 1
      %p98 = scmp.eq.s32.totalorder %s18, 1
      %p99 = scmp.ne.s32.totalorder %s94, %s96
      %p100 = scmp.eq.s32.totalorder %s18, 0
      %p101 = por %p99, %p100
      %p102 = scmp.ne.s32.totalorder %s94, %s96
      %p103 = scmp.eq.s32.totalorder %s23, 1
      %p104 = por %p102, %p103
      %p105 = scmp.ne.s32.totalorder %s96, %s97
      %p106 = scmp.eq.s32.totalorder %s23, 0
      %p107 = por %p105, %p106
      %p108 = scmp.ne.s32.totalorder %s96, %s97
      %p109 = scmp.eq.s32.totalorder %s24, 1
      %p110 = por %p108, %p109
      %p112 = scmp.ne.s32.totalorder %s97, %s111
      %p113 = scmp.eq.s32.totalorder %s24, 0
      %p114 = por %p112, %p113
      %s116 = sadd.s32 %s115, 1
      %p119 = scmp.eq.s32.totalorder %s18, 1
      %p120 = scmp.ne.s32.totalorder %s115, %s117
      %p121 = scmp.eq.s32.totalorder %s18, 0
      %p122 = por %p120, %p121
      %p123 = scmp.ne.s32.totalorder %s115, %s117
      %p124 = scmp.eq.s32.totalorder %s23, 1
      %p125 = por %p123, %p124
      %p126 = scmp.ne.s32.totalorder %s117, %s118
      %p127 = scmp.eq.s32.totalorder %s23, 0
      %p128 = por %p126, %p127
      %p129 = scmp.ne.s32.totalorder %s117, %s118
      %p130 = scmp.eq.s32.totalorder %s24, 1
      %p131 = por %p129, %p130
      %p133 = scmp.ne.s32.totalorder %s118, %s132
      %p134 = scmp.eq.s32.totalorder %s24, 0
      %p135 = por %p133, %p134
      %s137 = sadd.s32 %s136, 1
      %p140 = scmp.eq.s32.totalorder %s18, 1
      %p141 = scmp.ne.s32.totalorder %s136, %s138
      %p142 = scmp.eq.s32.totalorder %s18, 0
      %p143 = por %p141, %p142
      %p144 = scmp.ne.s32.totalorder %s136, %s138
      %p145 = scmp.eq.s32.totalorder %s23, 1
      %p146 = por %p144, %p145
      %p147 = scmp.ne.s32.totalorder %s138, %s139
      %p148 = scmp.eq.s32.totalorder %s23, 0
      %p149 = por %p147, %p148
      %p150 = scmp.ne.s32.totalorder %s138, %s139
      %p151 = scmp.eq.s32.totalorder %s24, 1
      %p152 = por %p150, %p151
      %p154 = scmp.ne.s32.totalorder %s139, %s153
      %p155 = scmp.eq.s32.totalorder %s24, 0
      %p156 = por %p154, %p155
      %s158 = sadd.s32 %s157, 1
      %p161 = scmp.eq.s32.totalorder %s18, 1
      %p162 = scmp.ne.s32.totalorder %s157, %s159
      %p163 = scmp.eq.s32.totalorder %s18, 0
      %p164 = por %p162, %p163
      %p165 = scmp.ne.s32.totalorder %s157, %s159
      %p166 = scmp.eq.s32.totalorder %s23, 1
      %p167 = por %p165, %p166
      %p168 = scmp.ne.s32.totalorder %s159, %s160
      %p169 = scmp.eq.s32.totalorder %s23, 0
      %p170 = por %p168, %p169
      %p171 = scmp.ne.s32.totalorder %s159, %s160
      %p172 = scmp.eq.s32.totalorder %s24, 1
      %p173 = por %p171, %p172
      %p175 = scmp.ne.s32.totalorder %s160, %s174
      %p176 = scmp.eq.s32.totalorder %s24, 0
      %p177 = por %p175, %p176
      %s179 = sadd.s32 %s178, 1
      %p182 = scmp.eq.s32.totalorder %s18, 1
      %p183 = scmp.ne.s32.totalorder %s178, %s180
      %p184 = scmp.eq.s32.totalorder %s18, 0
      %p185 = por %p183, %p184
      %p186 = scmp.ne.s32.totalorder %s178, %s180
      %p187 = scmp.eq.s32.totalorder %s23, 1
      %p188 = por %p186, %p187
      %p189 = scmp.ne.s32.totalorder %s180, %s181
      %p190 = scmp.eq.s32.totalorder %s23, 0
      %p191 = por %p189, %p190
      %p192 = scmp.ne.s32.totalorder %s180, %s181
      %p193 = scmp.eq.s32.totalorder %s24, 1
      %p194 = por %p192, %p193
      %p196 = scmp.ne.s32.totalorder %s181, %s195
      %p197 = scmp.eq.s32.totalorder %s24, 0
      %p198 = por %p196, %p197
      %s200 = sadd.s32 %s199, 1
      %p203 = scmp.eq.s32.totalorder %s18, 1
      %p204 = scmp.ne.s32.totalorder %s199, %s201
      %p205 = scmp.eq.s32.totalorder %s18, 0
      %p206 = por %p204, %p205
      %p207 = scmp.ne.s32.totalorder %s199, %s201
      %p208 = scmp.eq.s32.totalorder %s23, 1
      %p209 = por %p207, %p208
      %p210 = scmp.ne.s32.totalorder %s201, %s202
      %p211 = scmp.eq.s32.totalorder %s23, 0
      %p212 = por %p210, %p211
      %p213 = scmp.ne.s32.totalorder %s201, %s202
      %p214 = scmp.eq.s32.totalorder %s24, 1
      %p215 = por %p213, %p214
      %p217 = scmp.ne.s32.totalorder %s202, %s216
      %p218 = scmp.eq.s32.totalorder %s24, 0
      %p219 = por %p217, %p218
      %s220 = ssub.s32 %s18, %s25
      %p221 = scmp.eq.s32.totalorder %s220, 0
      %s223 = sadd.s32 %s222, 1
      %s224 = scalar_select %p221, %s222, %s223
      %p227 = pneg %p221
      %p228 = scmp.eq.s32.totalorder %s18, 1
      %p229 = por %p227, %p228
      %p230 = scmp.ne.s32.totalorder %s222, %s225
      %p231 = scmp.eq.s32.totalorder %s18, 0
      %p232 = por %p230, %p231
      %p233 = scmp.ne.s32.totalorder %s222, %s225
      %p234 = scmp.eq.s32.totalorder %s23, 1
      %p235 = por %p233, %p234
      %p236 = scmp.ne.s32.totalorder %s225, %s226
      %p237 = scmp.eq.s32.totalorder %s23, 0
      %p238 = por %p236, %p237
      %p239 = scmp.ne.s32.totalorder %s225, %s226
      %p240 = scmp.eq.s32.totalorder %s24, 1
      %p241 = por %p239, %p240
      %p243 = scmp.ne.s32.totalorder %s226, %s242
      %p244 = scmp.eq.s32.totalorder %s24, 0
      %p245 = por %p243, %p244
      %p246 = scmp.le.s32.totalorder 1, %s18
      %p247 = scmp.lt.s32.totalorder %s18, 3
      %p248 = pnand %p246, %p247
      %p249 = pneg %p248
      // Predicated region
      $region9: #{tpu_custom_call.1} parent=5 // pred_check
        _
      $region10: #{tpu_custom_call.1} parent=5 // pred_check_branch
        %251 = sbr.rel (%p248) target = $region12
      $region11: #{tpu_custom_call.1} parent=5 // pred_region
        %s252 = ssub.s32 %s18, 1
        // Predicated region
        $region13: #{tpu_custom_call.1} parent=11 // pred_check
          %p253 = pneg %p65
        $region14: #{tpu_custom_call.1} parent=11 // pred_check_branch
          %255 = sbr.rel (%p253) target = $region16
        $region15: #{tpu_custom_call.1} parent=11 // pred_region
          _
        $region16: #{tpu_custom_call.1} parent=11 // pred_fallthru
          _
        // Predicated region
        $region17: #{tpu_custom_call.1} parent=11 // pred_check
          %p256 = pneg %p86
        $region18: #{tpu_custom_call.1} parent=11 // pred_check_branch
          %258 = sbr.rel (%p256) target = $region20
        $region19: #{tpu_custom_call.1} parent=11 // pred_region
          _
        $region20: #{tpu_custom_call.1} parent=11 // pred_fallthru
          _
        // Predicated region
        $region21: #{tpu_custom_call.1} parent=11 // pred_check
          %p259 = pneg %p107
        $region22: #{tpu_custom_call.1} parent=11 // pred_check_branch
          %261 = sbr.rel (%p259) target = $region24
        $region23: #{tpu_custom_call.1} parent=11 // pred_region
          _
        $region24: #{tpu_custom_call.1} parent=11 // pred_fallthru
          _
        // Predicated region
        $region25: #{tpu_custom_call.1} parent=11 // pred_check
          %p262 = pneg %p128
        $region26: #{tpu_custom_call.1} parent=11 // pred_check_branch
          %264 = sbr.rel (%p262) target = $region28
        $region27: #{tpu_custom_call.1} parent=11 // pred_region
          _
        $region28: #{tpu_custom_call.1} parent=11 // pred_fallthru
          _
        // Predicated region
        $region29: #{tpu_custom_call.1} parent=11 // pred_check
          %p265 = pneg %p149
        $region30: #{tpu_custom_call.1} parent=11 // pred_check_branch
          %267 = sbr.rel (%p265) target = $region32
        $region31: #{tpu_custom_call.1} parent=11 // pred_region
          _
        $region32: #{tpu_custom_call.1} parent=11 // pred_fallthru
          _
        // Predicated region
        $region33: #{tpu_custom_call.1} parent=11 // pred_check
          %p268 = pneg %p170
        $region34: #{tpu_custom_call.1} parent=11 // pred_check_branch
          %270 = sbr.rel (%p268) target = $region36
        $region35: #{tpu_custom_call.1} parent=11 // pred_region
          _
        $region36: #{tpu_custom_call.1} parent=11 // pred_fallthru
          _
        // Predicated region
        $region37: #{tpu_custom_call.1} parent=11 // pred_check
          %p271 = pneg %p191
        $region38: #{tpu_custom_call.1} parent=11 // pred_check_branch
          %273 = sbr.rel (%p271) target = $region40
        $region39: #{tpu_custom_call.1} parent=11 // pred_region
          _
        $region40: #{tpu_custom_call.1} parent=11 // pred_fallthru
          _
        // Predicated region
        $region41: #{tpu_custom_call.1} parent=11 // pred_check
          %p274 = pneg %p212
        $region42: #{tpu_custom_call.1} parent=11 // pred_check_branch
          %276 = sbr.rel (%p274) target = $region44
        $region43: #{tpu_custom_call.1} parent=11 // pred_region
          _
        $region44: #{tpu_custom_call.1} parent=11 // pred_fallthru
          _
      $region12: #{tpu_custom_call.1} parent=5 // pred_fallthru
        _
      %p277 = scmp.lt.s32.totalorder %s18, 2
      // Predicated region
      $region45: #{tpu_custom_call.1} parent=5 // pred_check
        %p278 = pneg %p277
      $region46: #{tpu_custom_call.1} parent=5 // pred_check_branch
        %280 = sbr.rel (%p278) target = $region48
      $region47: #{tpu_custom_call.1} parent=5 // pred_region
        // Predicated region
        $region49: #{tpu_custom_call.1} parent=47 // pred_check
          %p281 = pneg %p38
        $region50: #{tpu_custom_call.1} parent=47 // pred_check_branch
          %283 = sbr.rel (%p281) target = $region52
        $region51: #{tpu_custom_call.1} parent=47 // pred_region
          %p284 = scmp.lt.s32.totalorder %s18, 1
          %s285 = scalar_select %p284, %s18, 1
          %s286 = smul.addr %s285, 72
          %s287 = smul.addr %s286, 8
          %s288 = scalar_lea.vmem %s0, %s287
        $region52: #{tpu_custom_call.1} parent=47 // pred_fallthru
          _
      $region48: #{tpu_custom_call.1} parent=5 // pred_fallthru
        _
      %p289 = scmp.le.s32.totalorder 1, %s18
      %p290 = scmp.lt.s32.totalorder %s18, 3
      %p291 = pnand %p289, %p290
      %p292 = pneg %p291
      // Predicated region
      $region53: #{tpu_custom_call.1} parent=5 // pred_check
        _
      $region54: #{tpu_custom_call.1} parent=5 // pred_check_branch
        %294 = sbr.rel (%p291) target = $region56
      $region55: #{tpu_custom_call.1} parent=5 // pred_region
        %s295 = ssub.s32 %s18, 1
        %p296 = scmp.lt.s32.totalorder %s23, 1
        %s297 = scalar_select %p296, %s23, 1
        %s298 = smul.addr %s297, 72
        %s299 = smul.addr %s298, 8
        %s300 = scalar_lea.vmem %s0, %s299
        %p301 = pneg %p44
        %p302 = pneg %p41
        %p303 = pneg %p65
        %p304 = pneg %p62
        %p305 = pneg %p86
        %p306 = pneg %p83
        %p307 = pneg %p107
        %p308 = pneg %p104
        %p309 = pneg %p128
        %p310 = pneg %p125
        %p311 = pneg %p149
        %p312 = pneg %p146
        %p313 = pneg %p170
        %p314 = pneg %p167
        %p315 = pneg %p191
        %p316 = pneg %p188
        %p317 = pneg %p212
        %p318 = pneg %p209
        %p319 = pneg %p238
        %p320 = pneg %p235
        %s321 = sand.u32 %s225, 1
        %s322 = scalar_lea.sflag [#allocation4], %s321
        %s323 = sand.u32 %s225, 1
        %s324 = smul.addr %s323, 32
        %s325 = scalar_lea.vmem [#allocation3], %s324
        %p326 = scmp.lt.s32.totalorder %s23, 1
        %s327 = scalar_select %p326, %s23, 1
        %s328 = smul.addr %s327, 72
        %s329 = smul.addr %s328, 8
        %s330 = scalar_lea.vmem %s0, %s329
        %332 = vst [vmem:[#allocation2] sm:$0xff] 0.0
        %333 = vst [vmem:[#allocation2 + $0x8] sm:$0x1] 0.0
        %334 = vst [vmem:[#allocation2 + $0x10] sm:$0xff] 0.0
        %335 = vst [vmem:[#allocation2 + $0x18] sm:$0x1] 0.0
        %336 = vst [vmem:[#allocation2 + $0x20] sm:$0xff] 0.0
        %337 = vst [vmem:[#allocation2 + $0x28] sm:$0x1] 0.0
        %338 = vst [vmem:[#allocation2 + $0x30] sm:$0xff] 0.0
        %339 = vst [vmem:[#allocation2 + $0x38] sm:$0x1] 0.0
        %340 = vst [vmem:[#allocation2 + $0x40] sm:$0xff] 0.0
        %341 = vst [vmem:[#allocation2 + $0x48] sm:$0x1] 0.0
        %342 = vst [vmem:[#allocation2 + $0x50] sm:$0xff] 0.0
        %343 = vst [vmem:[#allocation2 + $0x58] sm:$0x1] 0.0
        %344 = vst [vmem:[#allocation2 + $0x60] sm:$0xff] 0.0
        %345 = vst [vmem:[#allocation2 + $0x68] sm:$0x1] 0.0
        %346 = vst [vmem:[#allocation2 + $0x70] sm:$0xff] 0.0
        %347 = vst [vmem:[#allocation2 + $0x78] sm:$0x1] 0.0
        %348 = vst [vmem:[#allocation2 + $0x80] sm:$0xff] 0.0
        %349 = vst [vmem:[#allocation2 + $0x88] sm:$0x1] 0.0
        %350 = vst [vmem:[#allocation2 + $0x90] sm:$0xff] 0.0
        %351 = vst [vmem:[#allocation2 + $0x98] sm:$0x1] 0.0
        %352 = vst [vmem:[#allocation2 + $0xa0] sm:$0xff] 0.0
        %353 = vst [vmem:[#allocation2 + $0xa8] sm:$0x1] 0.0
        %354 = vst [vmem:[#allocation2 + $0xb0] sm:$0xff] 0.0
        %355 = vst [vmem:[#allocation2 + $0xb8] sm:$0x1] 0.0
        %356 = vst [vmem:[#allocation2 + $0xc0] sm:$0xff] 0.0
        %357 = vst [vmem:[#allocation2 + $0xc8] sm:$0x1] 0.0
        %358 = vst [vmem:[#allocation2 + $0xd0] sm:$0xff] 0.0
        %359 = vst [vmem:[#allocation2 + $0xd8] sm:$0x1] 0.0
        %360 = vst [vmem:[#allocation2 + $0xe0] sm:$0xff] 0.0
        %361 = vst [vmem:[#allocation2 + $0xe8] sm:$0x1] 0.0
        %362 = vst [vmem:[#allocation2 + $0xf0] sm:$0xff] 0.0
        %363 = vst [vmem:[#allocation2 + $0xf8] sm:$0x1] 0.0
        %364 = vst [vmem:[#allocation2 + $0x100] sm:$0xff] 0.0
        %365 = vst [vmem:[#allocation2 + $0x108] sm:$0x1] 0.0
        %366 = vst [vmem:[#allocation2 + $0x110] sm:$0xff] 0.0
        %367 = vst [vmem:[#allocation2 + $0x118] sm:$0x1] 0.0
        %368 = vst [vmem:[#allocation2 + $0x120] sm:$0xff] 0.0
        %369 = vst [vmem:[#allocation2 + $0x128] sm:$0x1] 0.0
        %370 = vst [vmem:[#allocation2 + $0x130] sm:$0xff] 0.0
        %371 = vst [vmem:[#allocation2 + $0x138] sm:$0x1] 0.0
        %372 = vst [vmem:[#allocation2 + $0x140] sm:$0xff] 0.0
        %373 = vst [vmem:[#allocation2 + $0x148] sm:$0x1] 0.0
        %374 = vst [vmem:[#allocation2 + $0x150] sm:$0xff] 0.0
        %375 = vst [vmem:[#allocation2 + $0x158] sm:$0x1] 0.0
        %376 = vst [vmem:[#allocation2 + $0x160] sm:$0xff] 0.0
        %377 = vst [vmem:[#allocation2 + $0x168] sm:$0x1] 0.0
        %378 = vst [vmem:[#allocation2 + $0x170] sm:$0xff] 0.0
        %379 = vst [vmem:[#allocation2 + $0x178] sm:$0x1] 0.0
        %380 = vst [vmem:[#allocation2 + $0x180] sm:$0xff] 0.0
        %381 = vst [vmem:[#allocation2 + $0x188] sm:$0x1] 0.0
        %382 = vst [vmem:[#allocation2 + $0x190] sm:$0xff] 0.0
        %383 = vst [vmem:[#allocation2 + $0x198] sm:$0x1] 0.0
        %384 = vst [vmem:[#allocation2 + $0x1a0] sm:$0xff] 0.0
        %385 = vst [vmem:[#allocation2 + $0x1a8] sm:$0x1] 0.0
        %386 = vst [vmem:[#allocation2 + $0x1b0] sm:$0xff] 0.0
        %387 = vst [vmem:[#allocation2 + $0x1b8] sm:$0x1] 0.0
        %388 = vst [vmem:[#allocation2 + $0x1c0] sm:$0xff] 0.0
        %389 = vst [vmem:[#allocation2 + $0x1c8] sm:$0x1] 0.0
        %390 = vst [vmem:[#allocation2 + $0x1d0] sm:$0xff] 0.0
        %391 = vst [vmem:[#allocation2 + $0x1d8] sm:$0x1] 0.0
        %392 = vst [vmem:[#allocation2 + $0x1e0] sm:$0xff] 0.0
        %393 = vst [vmem:[#allocation2 + $0x1e8] sm:$0x1] 0.0
        %394 = vst [vmem:[#allocation2 + $0x1f0] sm:$0xff] 0.0
        %395 = vst [vmem:[#allocation2 + $0x1f8] sm:$0x1] 0.0
        %396 = vst [vmem:[#allocation2 + $0x200] sm:$0xff] 0.0
        %397 = vst [vmem:[#allocation2 + $0x208] sm:$0x1] 0.0
        %398 = vst [vmem:[#allocation2 + $0x210] sm:$0xff] 0.0
        %399 = vst [vmem:[#allocation2 + $0x218] sm:$0x1] 0.0
        %400 = vst [vmem:[#allocation2 + $0x220] sm:$0xff] 0.0
        %401 = vst [vmem:[#allocation2 + $0x228] sm:$0x1] 0.0
        %402 = vst [vmem:[#allocation2 + $0x230] sm:$0xff] 0.0
        %403 = vst [vmem:[#allocation2 + $0x238] sm:$0x1] 0.0
        %v404 = vld [vmem:[%s1] sm:$0xf]
        %v405 = vld [vmem:[%s1 + $0x4] sm:$0xf]
        %v406 = vld [vmem:[%s1 + $0x8] sm:$0xf]
        %v407 = vld [vmem:[%s1 + $0xc] sm:$0xf]
        %v408 = vld [vmem:[%s1 + $0x10] sm:$0xf]
        %v409 = vld [vmem:[%s1 + $0x14] sm:$0xf]
        %v410 = vld [vmem:[%s1 + $0x18] sm:$0xf]
        %v411 = vld [vmem:[%s1 + $0x1c] sm:$0xf]
        %v412 = vld [vmem:[%s2] sm:$0x1]
        %s413 = scalar_lea.vmem %s330, 16
        %v414 = vld [vmem:[%s413 + $0x1] sm:$0xff]
        %v415 = vld [vmem:[%s413 + $0x11] sm:$0xff]
        %v416 = vld [vmem:[%s413 + $0x21] sm:$0xff]
        %v417 = vld [vmem:[%s413 + $0x31] sm:$0xff]
        %v418 = vld [vmem:[%s413 + $0x41] sm:$0xff]
        %v419 = vld [vmem:[%s413 + $0x51] sm:$0xff]
        %v420 = vld [vmem:[%s413 + $0x61] sm:$0xff]
        %v421 = vld [vmem:[%s413 + $0x71] sm:$0xff]
        %v422 = vpack.c.bf16 %v415, %v414
        %v423 = vpack.c.bf16 %v417, %v416
        %v424 = vpack.c.bf16 %v419, %v418
        %v425 = vpack.c.bf16 %v421, %v420
        %v427 = vlaneseq
        %v428 = vshrl.u32 %v427, 7
        %v429 = vsub.s32 0, %v428
        %v430 = vrot.slane %v412, %v429
        %v440 = vunpack.c.l.b16 %v404
        %v441 = vunpack.c.l.b16 %v405
        %v442 = vunpack.c.l.b16 %v406
        %v443 = vunpack.c.l.b16 %v407
        %v444 = vunpack.c.l.b16 %v408
        %v445 = vunpack.c.l.b16 %v409
        %v446 = vunpack.c.l.b16 %v410
        %v447 = vunpack.c.l.b16 %v411
        %v448 = vpack.c.b16 %v441, %v440
        %v449 = vpack.c.b16 %v443, %v442
        %v450 = vpack.c.b16 %v445, %v444
        %v451 = vpack.c.b16 %v447, %v446
        %vm456 = vcmask 523264
        %v458 = vsel %vm456, %v422, 0
        %v461 = vsel %vm456, %v423, 0
        %v464 = vsel %vm456, %v424, 0
        %v467 = vsel %vm456, %v425, 0
        %469 = vmatprep.subr.bf16.mxu0 0
        %470 = vmatpush1.bf16.msra.mxu0 %v448
        %471 = vmatprep.subr.bf16.mxu0 0
        %472 = vmatpush1.bf16.msra.mxu0 %v449
        %473 = vmatprep.subr.bf16.mxu0 0
        %474 = vmatpush1.bf16.msra.mxu0 %v450
        %475 = vmatprep.subr.bf16.mxu0 0
        %476 = vmatpush1.bf16.msra.mxu0 %v451
        %477 = vmatprep.subr.bf16.mxu0 0
        %478 = vmatpush1.bf16.msra.mxu0 0
        %479 = vmatprep.subr.bf16.mxu0 0
        %480 = vmatpush1.bf16.msra.mxu0 0
        %481 = vmatprep.subr.bf16.mxu0 0
        %482 = vmatpush1.bf16.msra.mxu0 0
        %483 = vmatprep.subr.bf16.mxu0 0
        %484 = vmatpush1.bf16.msra.mxu0 0
        %485 = vmatprep.subr.bf16.mxu0 0
        %486 = vmatpush1.bf16.msra.mxu0 0
        %487 = vmatprep.subr.bf16.mxu0 0
        %488 = vmatpush1.bf16.msra.mxu0 0
        %489 = vmatprep.subr.bf16.mxu0 0
        %490 = vmatpush1.bf16.msra.mxu0 0
        %491 = vmatprep.subr.bf16.mxu0 0
        %492 = vmatpush1.bf16.msra.mxu0 0
        %493 = vmatprep.subr.bf16.mxu0 0
        %494 = vmatpush1.bf16.msra.mxu0 0
        %495 = vmatprep.subr.bf16.mxu0 0
        %496 = vmatpush1.bf16.msra.mxu0 0
        %497 = vmatprep.subr.bf16.mxu0 0
        %498 = vmatpush1.bf16.msra.mxu0 0
        %499 = vmatprep.subr.bf16.mxu0 0
        %500 = vmatpush1.bf16.msra.mxu0 0
        %501 = vmatprep.mubr.bf16.mxu0 0
        %502 = vmatmul.mubr.bf16.gmra.mrb[0].mxu0 %v458
        %v503 = vpop.f32.mrb[0].mxu0
        %v504 = vadd.f32 %v430, %v503
        %v505 = vpop.f32.mrb[0].mxu0
        %v506 = vpop.f32.mrb[0].mxu0
        %v507 = vadd.f32 %v430, %v506
        %v508 = vpop.f32.mrb[0].mxu0
        %509 = vmatprep.mubr.bf16.mxu0 0
        %510 = vmatmul.mubr.bf16.gmra.mrb[0].mxu0 %v461
        %v511 = vpop.f32.mrb[0].mxu0
        %v512 = vadd.f32 %v430, %v511
        %v513 = vpop.f32.mrb[0].mxu0
        %v514 = vpop.f32.mrb[0].mxu0
        %v515 = vadd.f32 %v430, %v514
        %v516 = vpop.f32.mrb[0].mxu0
        %517 = vmatprep.mubr.bf16.mxu0 0
        %518 = vmatmul.mubr.bf16.gmra.mrb[0].mxu0 %v464
        %v519 = vpop.f32.mrb[0].mxu0
        %v520 = vadd.f32 %v430, %v519
        %v521 = vpop.f32.mrb[0].mxu0
        %v522 = vpop.f32.mrb[0].mxu0
        %v523 = vadd.f32 %v430, %v522
        %v524 = vpop.f32.mrb[0].mxu0
        %525 = vmatprep.mubr.bf16.mxu0 0
        %526 = vmatmul.mubr.bf16.gmra.mrb[0].mxu0 %v467
        %v527 = vpop.f32.mrb[0].mxu0
        %v528 = vadd.f32 %v430, %v527
        %v529 = vpop.f32.mrb[0].mxu0
        %v530 = vpop.f32.mrb[0].mxu0
        %v531 = vadd.f32 %v430, %v530
        %v532 = vpop.f32.mrb[0].mxu0
        %533 = vdwg.mxu0
        %v534 = vmax.f32 %v504, 0.0
        %v535 = vmax.f32 %v507, 0.0
        %v536 = vmax.f32 %v512, 0.0
        %v537 = vmax.f32 %v515, 0.0
        %v538 = vmax.f32 %v520, 0.0
        %v539 = vmax.f32 %v523, 0.0
        %v540 = vmax.f32 %v528, 0.0
        %v541 = vmax.f32 %v531, 0.0
        %s542 = scalar_lea.vmem [#allocation2], 16
        %543 = vst [vmem:[%s542 + $0x1] sm:$0xff] %v534
        %544 = vst [vmem:[%s542 + $0x11] sm:$0xff] %v535
        %545 = vst [vmem:[%s542 + $0x21] sm:$0xff] %v536
        %546 = vst [vmem:[%s542 + $0x31] sm:$0xff] %v537
        %547 = vst [vmem:[%s542 + $0x41] sm:$0xff] %v538
        %548 = vst [vmem:[%s542 + $0x51] sm:$0xff] %v539
        %549 = vst [vmem:[%s542 + $0x61] sm:$0xff] %v540
        %550 = vst [vmem:[%s542 + $0x71] sm:$0xff] %v541
        %s551 = scalar_lea.vmem %s330, 160
        %v552 = vld [vmem:[%s551] sm:$0xff]
        %v553 = vld [vmem:[%s551 + $0x10] sm:$0xff]
        %v554 = vld [vmem:[%s551 + $0x20] sm:$0xff]
        %v555 = vld [vmem:[%s551 + $0x30] sm:$0xff]
        %v556 = vld [vmem:[%s551 + $0x40] sm:$0xff]
        %v557 = vld [vmem:[%s551 + $0x50] sm:$0xff]
        %v558 = vld [vmem:[%s551 + $0x60] sm:$0xff]
        %v559 = vld [vmem:[%s551 + $0x70] sm:$0xff]
        %v560 = vpack.c.bf16 %v553, %v552
        %v561 = vpack.c.bf16 %v555, %v554
        %v562 = vpack.c.bf16 %v557, %v556
        %v563 = vpack.c.bf16 %v559, %v558
        %v565 = vsel %vm456, %v560, 0
        %v568 = vsel %vm456, %v561, 0
        %v571 = vsel %vm456, %v562, 0
        %v574 = vsel %vm456, %v563, 0
        %576 = vmatprep.subr.bf16.mxu0 0
        %577 = vmatpush1.bf16.msra.mxu0 %v448
        %578 = vmatprep.subr.bf16.mxu0 0
        %579 = vmatpush1.bf16.msra.mxu0 %v449
        %580 = vmatprep.subr.bf16.mxu0 0
        %581 = vmatpush1.bf16.msra.mxu0 %v450
        %582 = vmatprep.subr.bf16.mxu0 0
        %583 = vmatpush1.bf16.msra.mxu0 %v451
        %584 = vmatprep.subr.bf16.mxu0 0
        %585 = vmatpush1.bf16.msra.mxu0 0
        %586 = vmatprep.subr.bf16.mxu0 0
        %587 = vmatpush1.bf16.msra.mxu0 0
        %588 = vmatprep.subr.bf16.mxu0 0
        %589 = vmatpush1.bf16.msra.mxu0 0
        %590 = vmatprep.subr.bf16.mxu0 0
        %591 = vmatpush1.bf16.msra.mxu0 0
        %592 = vmatprep.subr.bf16.mxu0 0
        %593 = vmatpush1.bf16.msra.mxu0 0
        %594 = vmatprep.subr.bf16.mxu0 0
        %595 = vmatpush1.bf16.msra.mxu0 0
        %596 = vmatprep.subr.bf16.mxu0 0
        %597 = vmatpush1.bf16.msra.mxu0 0
        %598 = vmatprep.subr.bf16.mxu0 0
        %599 = vmatpush1.bf16.msra.mxu0 0
        %600 = vmatprep.subr.bf16.mxu0 0
        %601 = vmatpush1.bf16.msra.mxu0 0
        %602 = vmatprep.subr.bf16.mxu0 0
        %603 = vmatpush1.bf16.msra.mxu0 0
        %604 = vmatprep.subr.bf16.mxu0 0
        %605 = vmatpush1.bf16.msra.mxu0 0
        %606 = vmatprep.subr.bf16.mxu0 0
        %607 = vmatpush1.bf16.msra.mxu0 0
        %608 = vmatprep.mubr.bf16.mxu0 0
        %609 = vmatmul.mubr.bf16.gmra.mrb[0].mxu0 %v565
        %v610 = vpop.f32.mrb[0].mxu0
        %v611 = vadd.f32 %v430, %v610
        %v612 = vpop.f32.mrb[0].mxu0
        %v613 = vpop.f32.mrb[0].mxu0
        %v614 = vadd.f32 %v430, %v613
        %v615 = vpop.f32.mrb[0].mxu0
        %616 = vmatprep.mubr.bf16.mxu0 0
        %617 = vmatmul.mubr.bf16.gmra.mrb[0].mxu0 %v568
        %v618 = vpop.f32.mrb[0].mxu0
        %v619 = vadd.f32 %v430, %v618
        %v620 = vpop.f32.mrb[0].mxu0
        %v621 = vpop.f32.mrb[0].mxu0
        %v622 = vadd.f32 %v430, %v621
        %v623 = vpop.f32.mrb[0].mxu0
        %624 = vmatprep.mubr.bf16.mxu0 0
        %625 = vmatmul.mubr.bf16.gmra.mrb[0].mxu0 %v571
        %v626 = vpop.f32.mrb[0].mxu0
        %v627 = vadd.f32 %v430, %v626
        %v628 = vpop.f32.mrb[0].mxu0
        %v629 = vpop.f32.mrb[0].mxu0
        %v630 = vadd.f32 %v430, %v629
        %v631 = vpop.f32.mrb[0].mxu0
        %632 = vmatprep.mubr.bf16.mxu0 0
        %633 = vmatmul.mubr.bf16.gmra.mrb[0].mxu0 %v574
        %v634 = vpop.f32.mrb[0].mxu0
        %v635 = vadd.f32 %v430, %v634
        %v636 = vpop.f32.mrb[0].mxu0
        %v637 = vpop.f32.mrb[0].mxu0
        %v638 = vadd.f32 %v430, %v637
        %v639 = vpop.f32.mrb[0].mxu0
        %640 = vdwg.mxu0
        %v641 = vmax.f32 %v611, 0.0
        %v642 = vmax.f32 %v614, 0.0
        %v643 = vmax.f32 %v619, 0.0
        %v644 = vmax.f32 %v622, 0.0
        %v645 = vmax.f32 %v627, 0.0
        %v646 = vmax.f32 %v630, 0.0
        %v647 = vmax.f32 %v635, 0.0
        %v648 = vmax.f32 %v638, 0.0
        %s649 = scalar_lea.vmem [#allocation2], 160
        %650 = vst [vmem:[%s649] sm:$0xff] %v641
        %651 = vst [vmem:[%s649 + $0x10] sm:$0xff] %v642
        %652 = vst [vmem:[%s649 + $0x20] sm:$0xff] %v643
        %653 = vst [vmem:[%s649 + $0x30] sm:$0xff] %v644
        %654 = vst [vmem:[%s649 + $0x40] sm:$0xff] %v645
        %655 = vst [vmem:[%s649 + $0x50] sm:$0xff] %v646
        %656 = vst [vmem:[%s649 + $0x60] sm:$0xff] %v647
        %657 = vst [vmem:[%s649 + $0x70] sm:$0xff] %v648
        %s658 = scalar_lea.vmem %s330, 288
        %v659 = vld [vmem:[%s658 + $0x1] sm:$0xff]
        %v660 = vld [vmem:[%s658 + $0x11] sm:$0xff]
        %v661 = vld [vmem:[%s658 + $0x21] sm:$0xff]
        %v662 = vld [vmem:[%s658 + $0x31] sm:$0xff]
        %v663 = vld [vmem:[%s658 + $0x41] sm:$0xff]
        %v664 = vld [vmem:[%s658 + $0x51] sm:$0xff]
        %v665 = vld [vmem:[%s658 + $0x61] sm:$0xff]
        %v666 = vld [vmem:[%s658 + $0x71] sm:$0xff]
        %v667 = vpack.c.bf16 %v660, %v659
        %v668 = vpack.c.bf16 %v662, %v661
        %v669 = vpack.c.bf16 %v664, %v663
        %v670 = vpack.c.bf16 %v666, %v665
        %v672 = vsel %vm456, %v667, 0
        %v675 = vsel %vm456, %v668, 0
        %v678 = vsel %vm456, %v669, 0
        %v681 = vsel %vm456, %v670, 0
        %683 = vmatprep.subr.bf16.mxu0 0
        %684 = vmatpush1.bf16.msra.mxu0 %v448
        %685 = vmatprep.subr.bf16.mxu0 0
        %686 = vmatpush1.bf16.msra.mxu0 %v449
        %687 = vmatprep.subr.bf16.mxu0 0
        %688 = vmatpush1.bf16.msra.mxu0 %v450
        %689 = vmatprep.subr.bf16.mxu0 0
        %690 = vmatpush1.bf16.msra.mxu0 %v451
        %691 = vmatprep.subr.bf16.mxu0 0
        %692 = vmatpush1.bf16.msra.mxu0 0
        %693 = vmatprep.subr.bf16.mxu0 0
        %694 = vmatpush1.bf16.msra.mxu0 0
        %695 = vmatprep.subr.bf16.mxu0 0
        %696 = vmatpush1.bf16.msra.mxu0 0
        %697 = vmatprep.subr.bf16.mxu0 0
        %698 = vmatpush1.bf16.msra.mxu0 0
        %699 = vmatprep.subr.bf16.mxu0 0
        %700 = vmatpush1.bf16.msra.mxu0 0
        %701 = vmatprep.subr.bf16.mxu0 0
        %702 = vmatpush1.bf16.msra.mxu0 0
        %703 = vmatprep.subr.bf16.mxu0 0
        %704 = vmatpush1.bf16.msra.mxu0 0
        %705 = vmatprep.subr.bf16.mxu0 0
        %706 = vmatpush1.bf16.msra.mxu0 0
        %707 = vmatprep.subr.bf16.mxu0 0
        %708 = vmatpush1.bf16.msra.mxu0 0
        %709 = vmatprep.subr.bf16.mxu0 0
        %710 = vmatpush1.bf16.msra.mxu0 0
        %711 = vmatprep.subr.bf16.mxu0 0
        %712 = vmatpush1.bf16.msra.mxu0 0
        %713 = vmatprep.subr.bf16.mxu0 0
        %714 = vmatpush1.bf16.msra.mxu0 0
        %715 = vmatprep.mubr.bf16.mxu0 0
        %716 = vmatmul.mubr.bf16.gmra.mrb[0].mxu0 %v672
        %v717 = vpop.f32.mrb[0].mxu0
        %v718 = vadd.f32 %v430, %v717
        %v719 = vpop.f32.mrb[0].mxu0
        %v720 = vpop.f32.mrb[0].mxu0
        %v721 = vadd.f32 %v430, %v720
        %v722 = vpop.f32.mrb[0].mxu0
        %723 = vmatprep.mubr.bf16.mxu0 0
        %724 = vmatmul.mubr.bf16.gmra.mrb[0].mxu0 %v675
        %v725 = vpop.f32.mrb[0].mxu0
        %v726 = vadd.f32 %v430, %v725
        %v727 = vpop.f32.mrb[0].mxu0
        %v728 = vpop.f32.mrb[0].mxu0
        %v729 = vadd.f32 %v430, %v728
        %v730 = vpop.f32.mrb[0].mxu0
        %731 = vmatprep.mubr.bf16.mxu0 0
        %732 = vmatmul.mubr.bf16.gmra.mrb[0].mxu0 %v678
        %v733 = vpop.f32.mrb[0].mxu0
        %v734 = vadd.f32 %v430, %v733
        %v735 = vpop.f32.mrb[0].mxu0
        %v736 = vpop.f32.mrb[0].mxu0
        %v737 = vadd.f32 %v430, %v736
        %v738 = vpop.f32.mrb[0].mxu0
        %739 = vmatprep.mubr.bf16.mxu0 0
        %740 = vmatmul.mubr.bf16.gmra.mrb[0].mxu0 %v681
        %v741 = vpop.f32.mrb[0].mxu0
        %v742 = vadd.f32 %v430, %v741
        %v743 = vpop.f32.mrb[0].mxu0
        %v744 = vpop.f32.mrb[0].mxu0
        %v745 = vadd.f32 %v430, %v744
        %v746 = vpop.f32.mrb[0].mxu0
        %747 = vdwg.mxu0
        %v748 = vmax.f32 %v718, 0.0
        %v749 = vmax.f32 %v721, 0.0
        %v750 = vmax.f32 %v726, 0.0
        %v751 = vmax.f32 %v729, 0.0
        %v752 = vmax.f32 %v734, 0.0
        %v753 = vmax.f32 %v737, 0.0
        %v754 = vmax.f32 %v742, 0.0
        %v755 = vmax.f32 %v745, 0.0
        %s756 = scalar_lea.vmem [#allocation2], 288
        %757 = vst [vmem:[%s756 + $0x1] sm:$0xff] %v748
        %758 = vst [vmem:[%s756 + $0x11] sm:$0xff] %v749
        %759 = vst [vmem:[%s756 + $0x21] sm:$0xff] %v750
        %760 = vst [vmem:[%s756 + $0x31] sm:$0xff] %v751
        %761 = vst [vmem:[%s756 + $0x41] sm:$0xff] %v752
        %762 = vst [vmem:[%s756 + $0x51] sm:$0xff] %v753
        %763 = vst [vmem:[%s756 + $0x61] sm:$0xff] %v754
        %764 = vst [vmem:[%s756 + $0x71] sm:$0xff] %v755
        %s765 = scalar_lea.vmem %s330, 432
        %v766 = vld [vmem:[%s765] sm:$0xff]
        %v767 = vld [vmem:[%s765 + $0x10] sm:$0xff]
        %v768 = vld [vmem:[%s765 + $0x20] sm:$0xff]
        %v769 = vld [vmem:[%s765 + $0x30] sm:$0xff]
        %v770 = vld [vmem:[%s765 + $0x40] sm:$0xff]
        %v771 = vld [vmem:[%s765 + $0x50] sm:$0xff]
        %v772 = vld [vmem:[%s765 + $0x60] sm:$0xff]
        %v773 = vld [vmem:[%s765 + $0x70] sm:$0xff]
        %v774 = vpack.c.bf16 %v767, %v766
        %v775 = vpack.c.bf16 %v769, %v768
        %v776 = vpack.c.bf16 %v771, %v770
        %v777 = vpack.c.bf16 %v773, %v772
        %v779 = vsel %vm456, %v774, 0
        %v782 = vsel %vm456, %v775, 0
        %v785 = vsel %vm456, %v776, 0
        %v788 = vsel %vm456, %v777, 0
        %790 = vmatprep.subr.bf16.mxu0 0
        %791 = vmatpush1.bf16.msra.mxu0 %v448
        %792 = vmatprep.subr.bf16.mxu0 0
        %793 = vmatpush1.bf16.msra.mxu0 %v449
        %794 = vmatprep.subr.bf16.mxu0 0
        %795 = vmatpush1.bf16.msra.mxu0 %v450
        %796 = vmatprep.subr.bf16.mxu0 0
        %797 = vmatpush1.bf16.msra.mxu0 %v451
        %798 = vmatprep.subr.bf16.mxu0 0
        %799 = vmatpush1.bf16.msra.mxu0 0
        %800 = vmatprep.subr.bf16.mxu0 0
        %801 = vmatpush1.bf16.msra.mxu0 0
        %802 = vmatprep.subr.bf16.mxu0 0
        %803 = vmatpush1.bf16.msra.mxu0 0
        %804 = vmatprep.subr.bf16.mxu0 0
        %805 = vmatpush1.bf16.msra.mxu0 0
        %806 = vmatprep.subr.bf16.mxu0 0
        %807 = vmatpush1.bf16.msra.mxu0 0
        %808 = vmatprep.subr.bf16.mxu0 0
        %809 = vmatpush1.bf16.msra.mxu0 0
        %810 = vmatprep.subr.bf16.mxu0 0
        %811 = vmatpush1.bf16.msra.mxu0 0
        %812 = vmatprep.subr.bf16.mxu0 0
        %813 = vmatpush1.bf16.msra.mxu0 0
        %814 = vmatprep.subr.bf16.mxu0 0
        %815 = vmatpush1.bf16.msra.mxu0 0
        %816 = vmatprep.subr.bf16.mxu0 0
        %817 = vmatpush1.bf16.msra.mxu0 0
        %818 = vmatprep.subr.bf16.mxu0 0
        %819 = vmatpush1.bf16.msra.mxu0 0
        %820 = vmatprep.subr.bf16.mxu0 0
        %821 = vmatpush1.bf16.msra.mxu0 0
        %822 = vmatprep.mubr.bf16.mxu0 0
        %823 = vmatmul.mubr.bf16.gmra.mrb[0].mxu0 %v779
        %v824 = vpop.f32.mrb[0].mxu0
        %v825 = vadd.f32 %v430, %v824
        %v826 = vpop.f32.mrb[0].mxu0
        %v827 = vpop.f32.mrb[0].mxu0
        %v828 = vadd.f32 %v430, %v827
        %v829 = vpop.f32.mrb[0].mxu0
        %830 = vmatprep.mubr.bf16.mxu0 0
        %831 = vmatmul.mubr.bf16.gmra.mrb[0].mxu0 %v782
        %v832 = vpop.f32.mrb[0].mxu0
        %v833 = vadd.f32 %v430, %v832
        %v834 = vpop.f32.mrb[0].mxu0
        %v835 = vpop.f32.mrb[0].mxu0
        %v836 = vadd.f32 %v430, %v835
        %v837 = vpop.f32.mrb[0].mxu0
        %838 = vmatprep.mubr.bf16.mxu0 0
        %839 = vmatmul.mubr.bf16.gmra.mrb[0].mxu0 %v785
        %v840 = vpop.f32.mrb[0].mxu0
        %v841 = vadd.f32 %v430, %v840
        %v842 = vpop.f32.mrb[0].mxu0
        %v843 = vpop.f32.mrb[0].mxu0
        %v844 = vadd.f32 %v430, %v843
        %v845 = vpop.f32.mrb[0].mxu0
        %846 = vmatprep.mubr.bf16.mxu0 0
        %847 = vmatmul.mubr.bf16.gmra.mrb[0].mxu0 %v788
        %v848 = vpop.f32.mrb[0].mxu0
        %v849 = vadd.f32 %v430, %v848
        %v850 = vpop.f32.mrb[0].mxu0
        %v851 = vpop.f32.mrb[0].mxu0
        %v852 = vadd.f32 %v430, %v851
        %v853 = vpop.f32.mrb[0].mxu0
        %854 = vdwg.mxu0
        %v855 = vmax.f32 %v825, 0.0
        %v856 = vmax.f32 %v828, 0.0
        %v857 = vmax.f32 %v833, 0.0
        %v858 = vmax.f32 %v836, 0.0
        %v859 = vmax.f32 %v841, 0.0
        %v860 = vmax.f32 %v844, 0.0
        %v861 = vmax.f32 %v849, 0.0
        %v862 = vmax.f32 %v852, 0.0
        %s863 = scalar_lea.vmem [#allocation2], 432
        %864 = vst [vmem:[%s863] sm:$0xff] %v855
        %865 = vst [vmem:[%s863 + $0x10] sm:$0xff] %v856
        %866 = vst [vmem:[%s863 + $0x20] sm:$0xff] %v857
        %867 = vst [vmem:[%s863 + $0x30] sm:$0xff] %v858
        %868 = vst [vmem:[%s863 + $0x40] sm:$0xff] %v859
        %869 = vst [vmem:[%s863 + $0x50] sm:$0xff] %v860
        %870 = vst [vmem:[%s863 + $0x60] sm:$0xff] %v861
        %871 = vst [vmem:[%s863 + $0x70] sm:$0xff] %v862
        %v872 = vld [vmem:[#allocation2] sm:$0xff]
        %v873 = vld [vmem:[#allocation2 + $0x10] sm:$0xff]
        %v874 = vld [vmem:[#allocation2 + $0x20] sm:$0xff]
        %v875 = vld [vmem:[#allocation2 + $0x30] sm:$0xff]
        %v876 = vld [vmem:[#allocation2 + $0x40] sm:$0xff]
        %v877 = vld [vmem:[#allocation2 + $0x50] sm:$0xff]
        %v878 = vld [vmem:[#allocation2 + $0x60] sm:$0xff]
        %v879 = vld [vmem:[#allocation2 + $0x70] sm:$0xff]
        %v880 = vpack.c.bf16 %v873, %v872
        %v881 = vpack.c.bf16 %v875, %v874
        %v882 = vpack.c.bf16 %v877, %v876
        %v883 = vpack.c.bf16 %v879, %v878
        %v884 = vld [vmem:[%s3] sm:$0xf]
        %v885 = vld [vmem:[%s3 + $0x4] sm:$0xf]
        %v886 = vld [vmem:[%s3 + $0x8] sm:$0xf]
        %v887 = vld [vmem:[%s3 + $0xc] sm:$0xf]
        %v888 = vld [vmem:[%s3 + $0x10] sm:$0xf]
        %v889 = vld [vmem:[%s3 + $0x14] sm:$0xf]
        %v890 = vld [vmem:[%s3 + $0x18] sm:$0xf]
        %v891 = vld [vmem:[%s3 + $0x1c] sm:$0xf]
        %v892 = vld [vmem:[%s3 + $0x20] sm:$0xf]
        %v893 = vld [vmem:[%s3 + $0x24] sm:$0xf]
        %v894 = vld [vmem:[%s3 + $0x28] sm:$0xf]
        %v895 = vld [vmem:[%s3 + $0x2c] sm:$0xf]
        %v896 = vld [vmem:[%s3 + $0x30] sm:$0xf]
        %v897 = vld [vmem:[%s3 + $0x34] sm:$0xf]
        %v898 = vld [vmem:[%s3 + $0x38] sm:$0xf]
        %v899 = vld [vmem:[%s3 + $0x3c] sm:$0xf]
        %s900 = scalar_lea.vmem [#allocation2], 144
        %v901 = vld [vmem:[%s900] sm:$0xff]
        %v902 = vld [vmem:[%s900 + $0x10] sm:$0xff]
        %v903 = vld [vmem:[%s900 + $0x20] sm:$0xff]
        %v904 = vld [vmem:[%s900 + $0x30] sm:$0xff]
        %v905 = vld [vmem:[%s900 + $0x40] sm:$0xff]
        %v906 = vld [vmem:[%s900 + $0x50] sm:$0xff]
        %v907 = vld [vmem:[%s900 + $0x60] sm:$0xff]
        %v908 = vld [vmem:[%s900 + $0x70] sm:$0xff]
        %v909 = vpack.c.bf16 %v902, %v901
        %v910 = vpack.c.bf16 %v904, %v903
        %v911 = vpack.c.bf16 %v906, %v905
        %v912 = vpack.c.bf16 %v908, %v907
        %s913 = scalar_lea.vmem %s3, 64
        %v914 = vld [vmem:[%s913] sm:$0xf]
        %v915 = vld [vmem:[%s913 + $0x4] sm:$0xf]
        %v916 = vld [vmem:[%s913 + $0x8] sm:$0xf]
        %v917 = vld [vmem:[%s913 + $0xc] sm:$0xf]
        %v918 = vld [vmem:[%s913 + $0x10] sm:$0xf]
        %v919 = vld [vmem:[%s913 + $0x14] sm:$0xf]
        %v920 = vld [vmem:[%s913 + $0x18] sm:$0xf]
        %v921 = vld [vmem:[%s913 + $0x1c] sm:$0xf]
        %v922 = vld [vmem:[%s913 + $0x20] sm:$0xf]
        %v923 = vld [vmem:[%s913 + $0x24] sm:$0xf]
        %v924 = vld [vmem:[%s913 + $0x28] sm:$0xf]
        %v925 = vld [vmem:[%s913 + $0x2c] sm:$0xf]
        %v926 = vld [vmem:[%s913 + $0x30] sm:$0xf]
        %v927 = vld [vmem:[%s913 + $0x34] sm:$0xf]
        %v928 = vld [vmem:[%s913 + $0x38] sm:$0xf]
        %v929 = vld [vmem:[%s913 + $0x3c] sm:$0xf]
        %v946 = vunpack.c.l.b16 %v914
        %v947 = vunpack.c.l.b16 %v915
        %v948 = vunpack.c.l.b16 %v916
        %v949 = vunpack.c.l.b16 %v917
        %v950 = vunpack.c.l.b16 %v918
        %v951 = vunpack.c.l.b16 %v919
        %v952 = vunpack.c.l.b16 %v920
        %v953 = vunpack.c.l.b16 %v921
        %v954 = vunpack.c.l.b16 %v922
        %v955 = vunpack.c.l.b16 %v923
        %v956 = vunpack.c.l.b16 %v924
        %v957 = vunpack.c.l.b16 %v925
        %v958 = vunpack.c.l.b16 %v926
        %v959 = vunpack.c.l.b16 %v927
        %v960 = vunpack.c.l.b16 %v928
        %v961 = vunpack.c.l.b16 %v929
        %v962 = vpack.c.b16 %v947, %v946
        %v963 = vpack.c.b16 %v949, %v948
        %v964 = vpack.c.b16 %v951, %v950
        %v965 = vpack.c.b16 %v953, %v952
        %v966 = vpack.c.b16 %v955, %v954
        %v967 = vpack.c.b16 %v957, %v956
        %v968 = vpack.c.b16 %v959, %v958
        %v969 = vpack.c.b16 %v961, %v960
        %978 = vmatprep.subr.bf16.mxu0 0
        %979 = vmatpush1.bf16.msra.mxu0 %v962
        %980 = vmatprep.subr.bf16.mxu0 0
        %981 = vmatpush1.bf16.msra.mxu0 %v963
        %982 = vmatprep.subr.bf16.mxu0 0
        %983 = vmatpush1.bf16.msra.mxu0 %v964
        %984 = vmatprep.subr.bf16.mxu0 0
        %985 = vmatpush1.bf16.msra.mxu0 %v965
        %986 = vmatprep.subr.bf16.mxu0 0
        %987 = vmatpush1.bf16.msra.mxu0 %v966
        %988 = vmatprep.subr.bf16.mxu0 0
        %989 = vmatpush1.bf16.msra.mxu0 %v967
        %990 = vmatprep.subr.bf16.mxu0 0
        %991 = vmatpush1.bf16.msra.mxu0 %v968
        %992 = vmatprep.subr.bf16.mxu0 0
        %993 = vmatpush1.bf16.msra.mxu0 %v969
        %994 = vmatprep.subr.bf16.mxu0 0
        %995 = vmatpush1.bf16.msra.mxu0 0
        %996 = vmatprep.subr.bf16.mxu0 0
        %997 = vmatpush1.bf16.msra.mxu0 0
        %998 = vmatprep.subr.bf16.mxu0 0
        %999 = vmatpush1.bf16.msra.mxu0 0
        %1000 = vmatprep.subr.bf16.mxu0 0
        %1001 = vmatpush1.bf16.msra.mxu0 0
        %1002 = vmatprep.subr.bf16.mxu0 0
        %1003 = vmatpush1.bf16.msra.mxu0 0
        %1004 = vmatprep.subr.bf16.mxu0 0
        %1005 = vmatpush1.bf16.msra.mxu0 0
        %1006 = vmatprep.subr.bf16.mxu0 0
        %1007 = vmatpush1.bf16.msra.mxu0 0
        %1008 = vmatprep.subr.bf16.mxu0 0
        %1009 = vmatpush1.bf16.msra.mxu0 0
        %1010 = vmatprep.mubr.bf16.mxu0 0
        %1011 = vmatmul.mubr.bf16.gmra.mrb[0].mxu0 %v909
        %v1012 = vpop.f32.mrb[0].mxu0
        %v1013 = vadd.f32 0.0, %v1012
        %v1014 = vpop.f32.mrb[0].mxu0
        %v1015 = vpop.f32.mrb[0].mxu0
        %v1016 = vadd.f32 0.0, %v1015
        %v1017 = vpop.f32.mrb[0].mxu0
        %1018 = vmatprep.mubr.bf16.mxu0 0
        %1019 = vmatmul.mubr.bf16.gmra.mrb[0].mxu0 %v910
        %v1020 = vpop.f32.mrb[0].mxu0
        %v1021 = vadd.f32 0.0, %v1020
        %v1022 = vpop.f32.mrb[0].mxu0
        %v1023 = vpop.f32.mrb[0].mxu0
        %v1024 = vadd.f32 0.0, %v1023
        %v1025 = vpop.f32.mrb[0].mxu0
        %1026 = vmatprep.mubr.bf16.mxu0 0
        %1027 = vmatmul.mubr.bf16.gmra.mrb[0].mxu0 %v911
        %v1028 = vpop.f32.mrb[0].mxu0
        %v1029 = vadd.f32 0.0, %v1028
        %v1030 = vpop.f32.mrb[0].mxu0
        %v1031 = vpop.f32.mrb[0].mxu0
        %v1032 = vadd.f32 0.0, %v1031
        %v1033 = vpop.f32.mrb[0].mxu0
        %1034 = vmatprep.mubr.bf16.mxu0 0
        %1035 = vmatmul.mubr.bf16.gmra.mrb[0].mxu0 %v912
        %v1036 = vpop.f32.mrb[0].mxu0
        %v1037 = vadd.f32 0.0, %v1036
        %v1038 = vpop.f32.mrb[0].mxu0
        %v1039 = vpop.f32.mrb[0].mxu0
        %v1040 = vadd.f32 0.0, %v1039
        %v1041 = vpop.f32.mrb[0].mxu0
        %1042 = vdwg.mxu0
        %v1059 = vunpack.c.l.b16 %v884
        %v1060 = vunpack.c.l.b16 %v885
        %v1061 = vunpack.c.l.b16 %v886
        %v1062 = vunpack.c.l.b16 %v887
        %v1063 = vunpack.c.l.b16 %v888
        %v1064 = vunpack.c.l.b16 %v889
        %v1065 = vunpack.c.l.b16 %v890
        %v1066 = vunpack.c.l.b16 %v891
        %v1067 = vunpack.c.l.b16 %v892
        %v1068 = vunpack.c.l.b16 %v893
        %v1069 = vunpack.c.l.b16 %v894
        %v1070 = vunpack.c.l.b16 %v895
        %v1071 = vunpack.c.l.b16 %v896
        %v1072 = vunpack.c.l.b16 %v897
        %v1073 = vunpack.c.l.b16 %v898
        %v1074 = vunpack.c.l.b16 %v899
        %v1075 = vpack.c.b16 %v1060, %v1059
        %v1076 = vpack.c.b16 %v1062, %v1061
        %v1077 = vpack.c.b16 %v1064, %v1063
        %v1078 = vpack.c.b16 %v1066, %v1065
        %v1079 = vpack.c.b16 %v1068, %v1067
        %v1080 = vpack.c.b16 %v1070, %v1069
        %v1081 = vpack.c.b16 %v1072, %v1071
        %v1082 = vpack.c.b16 %v1074, %v1073
        %1091 = vmatprep.subr.bf16.mxu0 0
        %1092 = vmatpush1.bf16.msra.mxu0 %v1075
        %1093 = vmatprep.subr.bf16.mxu0 0
        %1094 = vmatpush1.bf16.msra.mxu0 %v1076
        %1095 = vmatprep.subr.bf16.mxu0 0
        %1096 = vmatpush1.bf16.msra.mxu0 %v1077
        %1097 = vmatprep.subr.bf16.mxu0 0
        %1098 = vmatpush1.bf16.msra.mxu0 %v1078
        %1099 = vmatprep.subr.bf16.mxu0 0
        %1100 = vmatpush1.bf16.msra.mxu0 %v1079
        %1101 = vmatprep.subr.bf16.mxu0 0
        %1102 = vmatpush1.bf16.msra.mxu0 %v1080
        %1103 = vmatprep.subr.bf16.mxu0 0
        %1104 = vmatpush1.bf16.msra.mxu0 %v1081
        %1105 = vmatprep.subr.bf16.mxu0 0
        %1106 = vmatpush1.bf16.msra.mxu0 %v1082
        %1107 = vmatprep.subr.bf16.mxu0 0
        %1108 = vmatpush1.bf16.msra.mxu0 0
        %1109 = vmatprep.subr.bf16.mxu0 0
        %1110 = vmatpush1.bf16.msra.mxu0 0
        %1111 = vmatprep.subr.bf16.mxu0 0
        %1112 = vmatpush1.bf16.msra.mxu0 0
        %1113 = vmatprep.subr.bf16.mxu0 0
        %1114 = vmatpush1.bf16.msra.mxu0 0
        %1115 = vmatprep.subr.bf16.mxu0 0
        %1116 = vmatpush1.bf16.msra.mxu0 0
        %1117 = vmatprep.subr.bf16.mxu0 0
        %1118 = vmatpush1.bf16.msra.mxu0 0
        %1119 = vmatprep.subr.bf16.mxu0 0
        %1120 = vmatpush1.bf16.msra.mxu0 0
        %1121 = vmatprep.subr.bf16.mxu0 0
        %1122 = vmatpush1.bf16.msra.mxu0 0
        %1123 = vmatprep.mubr.bf16.mxu0 0
        %1124 = vmatmul.mubr.bf16.gmra.mrb[0].mxu0 %v880
        %v1125 = vpop.f32.mrb[0].mxu0
        %v1126 = vadd.f32 %v1013, %v1125
        %v1127 = vpop.f32.mrb[0].mxu0
        %v1128 = vpop.f32.mrb[0].mxu0
        %v1129 = vadd.f32 %v1016, %v1128
        %v1130 = vpop.f32.mrb[0].mxu0
        %1131 = vmatprep.mubr.bf16.mxu0 0
        %1132 = vmatmul.mubr.bf16.gmra.mrb[0].mxu0 %v881
        %v1133 = vpop.f32.mrb[0].mxu0
        %v1134 = vadd.f32 %v1021, %v1133
        %v1135 = vpop.f32.mrb[0].mxu0
        %v1136 = vpop.f32.mrb[0].mxu0
        %v1137 = vadd.f32 %v1024, %v1136
        %v1138 = vpop.f32.mrb[0].mxu0
        %1139 = vmatprep.mubr.bf16.mxu0 0
        %1140 = vmatmul.mubr.bf16.gmra.mrb[0].mxu0 %v882
        %v1141 = vpop.f32.mrb[0].mxu0
        %v1142 = vadd.f32 %v1029, %v1141
        %v1143 = vpop.f32.mrb[0].mxu0
        %v1144 = vpop.f32.mrb[0].mxu0
        %v1145 = vadd.f32 %v1032, %v1144
        %v1146 = vpop.f32.mrb[0].mxu0
        %1147 = vmatprep.mubr.bf16.mxu0 0
        %1148 = vmatmul.mubr.bf16.gmra.mrb[0].mxu0 %v883
        %v1149 = vpop.f32.mrb[0].mxu0
        %v1150 = vadd.f32 %v1037, %v1149
        %v1151 = vpop.f32.mrb[0].mxu0
        %v1152 = vpop.f32.mrb[0].mxu0
        %v1153 = vadd.f32 %v1040, %v1152
        %v1154 = vpop.f32.mrb[0].mxu0
        %1155 = vdwg.mxu0
        %v1156 = vld [vmem:[#allocation2 + $0x1] sm:$0xff]
        %v1157 = vld [vmem:[#allocation2 + $0x11] sm:$0xff]
        %v1158 = vld [vmem:[#allocation2 + $0x21] sm:$0xff]
        %v1159 = vld [vmem:[#allocation2 + $0x31] sm:$0xff]
        %v1160 = vld [vmem:[#allocation2 + $0x41] sm:$0xff]
        %v1161 = vld [vmem:[#allocation2 + $0x51] sm:$0xff]
        %v1162 = vld [vmem:[#allocation2 + $0x61] sm:$0xff]
        %v1163 = vld [vmem:[#allocation2 + $0x71] sm:$0xff]
        %v1164 = vpack.c.bf16 %v1157, %v1156
        %v1165 = vpack.c.bf16 %v1159, %v1158
        %v1166 = vpack.c.bf16 %v1161, %v1160
        %v1167 = vpack.c.bf16 %v1163, %v1162
        %s1168 = scalar_lea.vmem %s3, 128
        %v1169 = vld [vmem:[%s1168] sm:$0xf]
        %v1170 = vld [vmem:[%s1168 + $0x4] sm:$0xf]
        %v1171 = vld [vmem:[%s1168 + $0x8] sm:$0xf]
        %v1172 = vld [vmem:[%s1168 + $0xc] sm:$0xf]
        %v1173 = vld [vmem:[%s1168 + $0x10] sm:$0xf]
        %v1174 = vld [vmem:[%s1168 + $0x14] sm:$0xf]
        %v1175 = vld [vmem:[%s1168 + $0x18] sm:$0xf]
        %v1176 = vld [vmem:[%s1168 + $0x1c] sm:$0xf]
        %v1177 = vld [vmem:[%s1168 + $0x20] sm:$0xf]
        %v1178 = vld [vmem:[%s1168 + $0x24] sm:$0xf]
        %v1179 = vld [vmem:[%s1168 + $0x28] sm:$0xf]
        %v1180 = vld [vmem:[%s1168 + $0x2c] sm:$0xf]
        %v1181 = vld [vmem:[%s1168 + $0x30] sm:$0xf]
        %v1182 = vld [vmem:[%s1168 + $0x34] sm:$0xf]
        %v1183 = vld [vmem:[%s1168 + $0x38] sm:$0xf]
        %v1184 = vld [vmem:[%s1168 + $0x3c] sm:$0xf]
        %v1201 = vunpack.c.l.b16 %v1169
        %v1202 = vunpack.c.l.b16 %v1170
        %v1203 = vunpack.c.l.b16 %v1171
        %v1204 = vunpack.c.l.b16 %v1172
        %v1205 = vunpack.c.l.b16 %v1173
        %v1206 = vunpack.c.l.b16 %v1174
        %v1207 = vunpack.c.l.b16 %v1175
        %v1208 = vunpack.c.l.b16 %v1176
        %v1209 = vunpack.c.l.b16 %v1177
        %v1210 = vunpack.c.l.b16 %v1178
        %v1211 = vunpack.c.l.b16 %v1179
        %v1212 = vunpack.c.l.b16 %v1180
        %v1213 = vunpack.c.l.b16 %v1181
        %v1214 = vunpack.c.l.b16 %v1182
        %v1215 = vunpack.c.l.b16 %v1183
        %v1216 = vunpack.c.l.b16 %v1184
        %v1217 = vpack.c.b16 %v1202, %v1201
        %v1218 = vpack.c.b16 %v1204, %v1203
        %v1219 = vpack.c.b16 %v1206, %v1205
        %v1220 = vpack.c.b16 %v1208, %v1207
        %v1221 = vpack.c.b16 %v1210, %v1209
        %v1222 = vpack.c.b16 %v1212, %v1211
        %v1223 = vpack.c.b16 %v1214, %v1213
        %v1224 = vpack.c.b16 %v1216, %v1215
        %1233 = vmatprep.subr.bf16.mxu0 0
        %1234 = vmatpush1.bf16.msra.mxu0 %v1217
        %1235 = vmatprep.subr.bf16.mxu0 0
        %1236 = vmatpush1.bf16.msra.mxu0 %v1218
        %1237 = vmatprep.subr.bf16.mxu0 0
        %1238 = vmatpush1.bf16.msra.mxu0 %v1219
        %1239 = vmatprep.subr.bf16.mxu0 0
        %1240 = vmatpush1.bf16.msra.mxu0 %v1220
        %1241 = vmatprep.subr.bf16.mxu0 0
        %1242 = vmatpush1.bf16.msra.mxu0 %v1221
        %1243 = vmatprep.subr.bf16.mxu0 0
        %1244 = vmatpush1.bf16.msra.mxu0 %v1222
        %1245 = vmatprep.subr.bf16.mxu0 0
        %1246 = vmatpush1.bf16.msra.mxu0 %v1223
        %1247 = vmatprep.subr.bf16.mxu0 0
        %1248 = vmatpush1.bf16.msra.mxu0 %v1224
        %1249 = vmatprep.subr.bf16.mxu0 0
        %1250 = vmatpush1.bf16.msra.mxu0 0
        %1251 = vmatprep.subr.bf16.mxu0 0
        %1252 = vmatpush1.bf16.msra.mxu0 0
        %1253 = vmatprep.subr.bf16.mxu0 0
        %1254 = vmatpush1.bf16.msra.mxu0 0
        %1255 = vmatprep.subr.bf16.mxu0 0
        %1256 = vmatpush1.bf16.msra.mxu0 0
        %1257 = vmatprep.subr.bf16.mxu0 0
        %1258 = vmatpush1.bf16.msra.mxu0 0
        %1259 = vmatprep.subr.bf16.mxu0 0
        %1260 = vmatpush1.bf16.msra.mxu0 0
        %1261 = vmatprep.subr.bf16.mxu0 0
        %1262 = vmatpush1.bf16.msra.mxu0 0
        %1263 = vmatprep.subr.bf16.mxu0 0
        %1264 = vmatpush1.bf16.msra.mxu0 0
        %1265 = vmatprep.mubr.bf16.mxu0 0
        %1266 = vmatmul.mubr.bf16.gmra.mrb[0].mxu0 %v1164
        %v1267 = vpop.f32.mrb[0].mxu0
        %v1268 = vadd.f32 0.0, %v1267
        %v1269 = vpop.f32.mrb[0].mxu0
        %v1270 = vpop.f32.mrb[0].mxu0
        %v1271 = vadd.f32 0.0, %v1270
        %v1272 = vpop.f32.mrb[0].mxu0
        %1273 = vmatprep.mubr.bf16.mxu0 0
        %1274 = vmatmul.mubr.bf16.gmra.mrb[0].mxu0 %v1165
        %v1275 = vpop.f32.mrb[0].mxu0
        %v1276 = vadd.f32 0.0, %v1275
        %v1277 = vpop.f32.mrb[0].mxu0
        %v1278 = vpop.f32.mrb[0].mxu0
        %v1279 = vadd.f32 0.0, %v1278
        %v1280 = vpop.f32.mrb[0].mxu0
        %1281 = vmatprep.mubr.bf16.mxu0 0
        %1282 = vmatmul.mubr.bf16.gmra.mrb[0].mxu0 %v1166
        %v1283 = vpop.f32.mrb[0].mxu0
        %v1284 = vadd.f32 0.0, %v1283
        %v1285 = vpop.f32.mrb[0].mxu0
        %v1286 = vpop.f32.mrb[0].mxu0
        %v1287 = vadd.f32 0.0, %v1286
        %v1288 = vpop.f32.mrb[0].mxu0
        %1289 = vmatprep.mubr.bf16.mxu0 0
        %1290 = vmatmul.mubr.bf16.gmra.mrb[0].mxu0 %v1167
        %v1291 = vpop.f32.mrb[0].mxu0
        %v1292 = vadd.f32 0.0, %v1291
        %v1293 = vpop.f32.mrb[0].mxu0
        %v1294 = vpop.f32.mrb[0].mxu0
        %v1295 = vadd.f32 0.0, %v1294
        %v1296 = vpop.f32.mrb[0].mxu0
        %1297 = vdwg.mxu0
        %v1298 = vadd.f32 %v1126, %v1268
        %v1299 = vadd.f32 %v1129, %v1271
        %v1300 = vadd.f32 %v1134, %v1276
        %v1301 = vadd.f32 %v1137, %v1279
        %v1302 = vadd.f32 %v1142, %v1284
        %v1303 = vadd.f32 %v1145, %v1287
        %v1304 = vadd.f32 %v1150, %v1292
        %v1305 = vadd.f32 %v1153, %v1295
        %v1306 = vld [vmem:[%s756] sm:$0xff]
        %v1307 = vld [vmem:[%s756 + $0x10] sm:$0xff]
        %v1308 = vld [vmem:[%s756 + $0x20] sm:$0xff]
        %v1309 = vld [vmem:[%s756 + $0x30] sm:$0xff]
        %v1310 = vld [vmem:[%s756 + $0x40] sm:$0xff]
        %v1311 = vld [vmem:[%s756 + $0x50] sm:$0xff]
        %v1312 = vld [vmem:[%s756 + $0x60] sm:$0xff]
        %v1313 = vld [vmem:[%s756 + $0x70] sm:$0xff]
        %v1314 = vpack.c.bf16 %v1307, %v1306
        %v1315 = vpack.c.bf16 %v1309, %v1308
        %v1316 = vpack.c.bf16 %v1311, %v1310
        %v1317 = vpack.c.bf16 %v1313, %v1312
        %s1318 = scalar_lea.vmem %s3, 192
        %v1319 = vld [vmem:[%s1318] sm:$0xf]
        %v1320 = vld [vmem:[%s1318 + $0x4] sm:$0xf]
        %v1321 = vld [vmem:[%s1318 + $0x8] sm:$0xf]
        %v1322 = vld [vmem:[%s1318 + $0xc] sm:$0xf]
        %v1323 = vld [vmem:[%s1318 + $0x10] sm:$0xf]
        %v1324 = vld [vmem:[%s1318 + $0x14] sm:$0xf]
        %v1325 = vld [vmem:[%s1318 + $0x18] sm:$0xf]
        %v1326 = vld [vmem:[%s1318 + $0x1c] sm:$0xf]
        %v1327 = vld [vmem:[%s1318 + $0x20] sm:$0xf]
        %v1328 = vld [vmem:[%s1318 + $0x24] sm:$0xf]
        %v1329 = vld [vmem:[%s1318 + $0x28] sm:$0xf]
        %v1330 = vld [vmem:[%s1318 + $0x2c] sm:$0xf]
        %v1331 = vld [vmem:[%s1318 + $0x30] sm:$0xf]
        %v1332 = vld [vmem:[%s1318 + $0x34] sm:$0xf]
        %v1333 = vld [vmem:[%s1318 + $0x38] sm:$0xf]
        %v1334 = vld [vmem:[%s1318 + $0x3c] sm:$0xf]
        %v1351 = vunpack.c.l.b16 %v1319
        %v1352 = vunpack.c.l.b16 %v1320
        %v1353 = vunpack.c.l.b16 %v1321
        %v1354 = vunpack.c.l.b16 %v1322
        %v1355 = vunpack.c.l.b16 %v1323
        %v1356 = vunpack.c.l.b16 %v1324
        %v1357 = vunpack.c.l.b16 %v1325
        %v1358 = vunpack.c.l.b16 %v1326
        %v1359 = vunpack.c.l.b16 %v1327
        %v1360 = vunpack.c.l.b16 %v1328
        %v1361 = vunpack.c.l.b16 %v1329
        %v1362 = vunpack.c.l.b16 %v1330
        %v1363 = vunpack.c.l.b16 %v1331
        %v1364 = vunpack.c.l.b16 %v1332
        %v1365 = vunpack.c.l.b16 %v1333
        %v1366 = vunpack.c.l.b16 %v1334
        %v1367 = vpack.c.b16 %v1352, %v1351
        %v1368 = vpack.c.b16 %v1354, %v1353
        %v1369 = vpack.c.b16 %v1356, %v1355
        %v1370 = vpack.c.b16 %v1358, %v1357
        %v1371 = vpack.c.b16 %v1360, %v1359
        %v1372 = vpack.c.b16 %v1362, %v1361
        %v1373 = vpack.c.b16 %v1364, %v1363
        %v1374 = vpack.c.b16 %v1366, %v1365
        %1383 = vmatprep.subr.bf16.mxu0 0
        %1384 = vmatpush1.bf16.msra.mxu0 %v1367
        %1385 = vmatprep.subr.bf16.mxu0 0
        %1386 = vmatpush1.bf16.msra.mxu0 %v1368
        %1387 = vmatprep.subr.bf16.mxu0 0
        %1388 = vmatpush1.bf16.msra.mxu0 %v1369
        %1389 = vmatprep.subr.bf16.mxu0 0
        %1390 = vmatpush1.bf16.msra.mxu0 %v1370
        %1391 = vmatprep.subr.bf16.mxu0 0
        %1392 = vmatpush1.bf16.msra.mxu0 %v1371
        %1393 = vmatprep.subr.bf16.mxu0 0
        %1394 = vmatpush1.bf16.msra.mxu0 %v1372
        %1395 = vmatprep.subr.bf16.mxu0 0
        %1396 = vmatpush1.bf16.msra.mxu0 %v1373
        %1397 = vmatprep.subr.bf16.mxu0 0
        %1398 = vmatpush1.bf16.msra.mxu0 %v1374
        %1399 = vmatprep.subr.bf16.mxu0 0
        %1400 = vmatpush1.bf16.msra.mxu0 0
        %1401 = vmatprep.subr.bf16.mxu0 0
        %1402 = vmatpush1.bf16.msra.mxu0 0
        %1403 = vmatprep.subr.bf16.mxu0 0
        %1404 = vmatpush1.bf16.msra.mxu0 0
        %1405 = vmatprep.subr.bf16.mxu0 0
        %1406 = vmatpush1.bf16.msra.mxu0 0
        %1407 = vmatprep.subr.bf16.mxu0 0
        %1408 = vmatpush1.bf16.msra.mxu0 0
        %1409 = vmatprep.subr.bf16.mxu0 0
        %1410 = vmatpush1.bf16.msra.mxu0 0
        %1411 = vmatprep.subr.bf16.mxu0 0
        %1412 = vmatpush1.bf16.msra.mxu0 0
        %1413 = vmatprep.subr.bf16.mxu0 0
        %1414 = vmatpush1.bf16.msra.mxu0 0
        %1415 = vmatprep.mubr.bf16.mxu0 0
        %1416 = vmatmul.mubr.bf16.gmra.mrb[0].mxu0 %v1314
        %v1417 = vpop.f32.mrb[0].mxu0
        %v1418 = vadd.f32 0.0, %v1417
        %v1419 = vpop.f32.mrb[0].mxu0
        %v1420 = vpop.f32.mrb[0].mxu0
        %v1421 = vadd.f32 0.0, %v1420
        %v1422 = vpop.f32.mrb[0].mxu0
        %1423 = vmatprep.mubr.bf16.mxu0 0
        %1424 = vmatmul.mubr.bf16.gmra.mrb[0].mxu0 %v1315
        %v1425 = vpop.f32.mrb[0].mxu0
        %v1426 = vadd.f32 0.0, %v1425
        %v1427 = vpop.f32.mrb[0].mxu0
        %v1428 = vpop.f32.mrb[0].mxu0
        %v1429 = vadd.f32 0.0, %v1428
        %v1430 = vpop.f32.mrb[0].mxu0
        %1431 = vmatprep.mubr.bf16.mxu0 0
        %1432 = vmatmul.mubr.bf16.gmra.mrb[0].mxu0 %v1316
        %v1433 = vpop.f32.mrb[0].mxu0
        %v1434 = vadd.f32 0.0, %v1433
        %v1435 = vpop.f32.mrb[0].mxu0
        %v1436 = vpop.f32.mrb[0].mxu0
        %v1437 = vadd.f32 0.0, %v1436
        %v1438 = vpop.f32.mrb[0].mxu0
        %1439 = vmatprep.mubr.bf16.mxu0 0
        %1440 = vmatmul.mubr.bf16.gmra.mrb[0].mxu0 %v1317
        %v1441 = vpop.f32.mrb[0].mxu0
        %v1442 = vadd.f32 0.0, %v1441
        %v1443 = vpop.f32.mrb[0].mxu0
        %v1444 = vpop.f32.mrb[0].mxu0
        %v1445 = vadd.f32 0.0, %v1444
        %v1446 = vpop.f32.mrb[0].mxu0
        %1447 = vdwg.mxu0
        %v1448 = vadd.f32 %v1298, %v1418
        %v1449 = vadd.f32 %v1299, %v1421
        %v1450 = vadd.f32 %v1300, %v1426
        %v1451 = vadd.f32 %v1301, %v1429
        %v1452 = vadd.f32 %v1302, %v1434
        %v1453 = vadd.f32 %v1303, %v1437
        %v1454 = vadd.f32 %v1304, %v1442
        %v1455 = vadd.f32 %v1305, %v1445
        %v1456 = vld [vmem:[%s863] sm:$0xff]
        %v1457 = vld [vmem:[%s863 + $0x10] sm:$0xff]
        %v1458 = vld [vmem:[%s863 + $0x20] sm:$0xff]
        %v1459 = vld [vmem:[%s863 + $0x30] sm:$0xff]
        %v1460 = vld [vmem:[%s863 + $0x40] sm:$0xff]
        %v1461 = vld [vmem:[%s863 + $0x50] sm:$0xff]
        %v1462 = vld [vmem:[%s863 + $0x60] sm:$0xff]
        %v1463 = vld [vmem:[%s863 + $0x70] sm:$0xff]
        %v1464 = vpack.c.bf16 %v1457, %v1456
        %v1465 = vpack.c.bf16 %v1459, %v1458
        %v1466 = vpack.c.bf16 %v1461, %v1460
        %v1467 = vpack.c.bf16 %v1463, %v1462
        %s1468 = scalar_lea.vmem %s3, 256
        %v1469 = vld [vmem:[%s1468] sm:$0xf]
        %v1470 = vld [vmem:[%s1468 + $0x4] sm:$0xf]
        %v1471 = vld [vmem:[%s1468 + $0x8] sm:$0xf]
        %v1472 = vld [vmem:[%s1468 + $0xc] sm:$0xf]
        %v1473 = vld [vmem:[%s1468 + $0x10] sm:$0xf]
        %v1474 = vld [vmem:[%s1468 + $0x14] sm:$0xf]
        %v1475 = vld [vmem:[%s1468 + $0x18] sm:$0xf]
        %v1476 = vld [vmem:[%s1468 + $0x1c] sm:$0xf]
        %v1477 = vld [vmem:[%s1468 + $0x20] sm:$0xf]
        %v1478 = vld [vmem:[%s1468 + $0x24] sm:$0xf]
        %v1479 = vld [vmem:[%s1468 + $0x28] sm:$0xf]
        %v1480 = vld [vmem:[%s1468 + $0x2c] sm:$0xf]
        %v1481 = vld [vmem:[%s1468 + $0x30] sm:$0xf]
        %v1482 = vld [vmem:[%s1468 + $0x34] sm:$0xf]
        %v1483 = vld [vmem:[%s1468 + $0x38] sm:$0xf]
        %v1484 = vld [vmem:[%s1468 + $0x3c] sm:$0xf]
        %v1501 = vunpack.c.l.b16 %v1469
        %v1502 = vunpack.c.l.b16 %v1470
        %v1503 = vunpack.c.l.b16 %v1471
        %v1504 = vunpack.c.l.b16 %v1472
        %v1505 = vunpack.c.l.b16 %v1473
        %v1506 = vunpack.c.l.b16 %v1474
        %v1507 = vunpack.c.l.b16 %v1475
        %v1508 = vunpack.c.l.b16 %v1476
        %v1509 = vunpack.c.l.b16 %v1477
        %v1510 = vunpack.c.l.b16 %v1478
        %v1511 = vunpack.c.l.b16 %v1479
        %v1512 = vunpack.c.l.b16 %v1480
        %v1513 = vunpack.c.l.b16 %v1481
        %v1514 = vunpack.c.l.b16 %v1482
        %v1515 = vunpack.c.l.b16 %v1483
        %v1516 = vunpack.c.l.b16 %v1484
        %v1517 = vpack.c.b16 %v1502, %v1501
        %v1518 = vpack.c.b16 %v1504, %v1503
        %v1519 = vpack.c.b16 %v1506, %v1505
        %v1520 = vpack.c.b16 %v1508, %v1507
        %v1521 = vpack.c.b16 %v1510, %v1509
        %v1522 = vpack.c.b16 %v1512, %v1511
        %v1523 = vpack.c.b16 %v1514, %v1513
        %v1524 = vpack.c.b16 %v1516, %v1515
        %1533 = vmatprep.subr.bf16.mxu0 0
        %1534 = vmatpush1.bf16.msra.mxu0 %v1517
        %1535 = vmatprep.subr.bf16.mxu0 0
        %1536 = vmatpush1.bf16.msra.mxu0 %v1518
        %1537 = vmatprep.subr.bf16.mxu0 0
        %1538 = vmatpush1.bf16.msra.mxu0 %v1519
        %1539 = vmatprep.subr.bf16.mxu0 0
        %1540 = vmatpush1.bf16.msra.mxu0 %v1520
        %1541 = vmatprep.subr.bf16.mxu0 0
        %1542 = vmatpush1.bf16.msra.mxu0 %v1521
        %1543 = vmatprep.subr.bf16.mxu0 0
        %1544 = vmatpush1.bf16.msra.mxu0 %v1522
        %1545 = vmatprep.subr.bf16.mxu0 0
        %1546 = vmatpush1.bf16.msra.mxu0 %v1523
        %1547 = vmatprep.subr.bf16.mxu0 0
        %1548 = vmatpush1.bf16.msra.mxu0 %v1524
        %1549 = vmatprep.subr.bf16.mxu0 0
        %1550 = vmatpush1.bf16.msra.mxu0 0
        %1551 = vmatprep.subr.bf16.mxu0 0
        %1552 = vmatpush1.bf16.msra.mxu0 0
        %1553 = vmatprep.subr.bf16.mxu0 0
        %1554 = vmatpush1.bf16.msra.mxu0 0
        %1555 = vmatprep.subr.bf16.mxu0 0
        %1556 = vmatpush1.bf16.msra.mxu0 0
        %1557 = vmatprep.subr.bf16.mxu0 0
        %1558 = vmatpush1.bf16.msra.mxu0 0
        %1559 = vmatprep.subr.bf16.mxu0 0
        %1560 = vmatpush1.bf16.msra.mxu0 0
        %1561 = vmatprep.subr.bf16.mxu0 0
        %1562 = vmatpush1.bf16.msra.mxu0 0
        %1563 = vmatprep.subr.bf16.mxu0 0
        %1564 = vmatpush1.bf16.msra.mxu0 0
        %1565 = vmatprep.mubr.bf16.mxu0 0
        %1566 = vmatmul.mubr.bf16.gmra.mrb[0].mxu0 %v1464
        %v1567 = vpop.f32.mrb[0].mxu0
        %v1568 = vadd.f32 0.0, %v1567
        %v1569 = vpop.f32.mrb[0].mxu0
        %v1570 = vpop.f32.mrb[0].mxu0
        %v1571 = vadd.f32 0.0, %v1570
        %v1572 = vpop.f32.mrb[0].mxu0
        %1573 = vmatprep.mubr.bf16.mxu0 0
        %1574 = vmatmul.mubr.bf16.gmra.mrb[0].mxu0 %v1465
        %v1575 = vpop.f32.mrb[0].mxu0
        %v1576 = vadd.f32 0.0, %v1575
        %v1577 = vpop.f32.mrb[0].mxu0
        %v1578 = vpop.f32.mrb[0].mxu0
        %v1579 = vadd.f32 0.0, %v1578
        %v1580 = vpop.f32.mrb[0].mxu0
        %1581 = vmatprep.mubr.bf16.mxu0 0
        %1582 = vmatmul.mubr.bf16.gmra.mrb[0].mxu0 %v1466
        %v1583 = vpop.f32.mrb[0].mxu0
        %v1584 = vadd.f32 0.0, %v1583
        %v1585 = vpop.f32.mrb[0].mxu0
        %v1586 = vpop.f32.mrb[0].mxu0
        %v1587 = vadd.f32 0.0, %v1586
        %v1588 = vpop.f32.mrb[0].mxu0
        %1589 = vmatprep.mubr.bf16.mxu0 0
        %1590 = vmatmul.mubr.bf16.gmra.mrb[0].mxu0 %v1467
        %v1591 = vpop.f32.mrb[0].mxu0
        %v1592 = vadd.f32 0.0, %v1591
        %v1593 = vpop.f32.mrb[0].mxu0
        %v1594 = vpop.f32.mrb[0].mxu0
        %v1595 = vadd.f32 0.0, %v1594
        %v1596 = vpop.f32.mrb[0].mxu0
        %1597 = vdwg.mxu0
        %v1598 = vadd.f32 %v1448, %v1568
        %v1599 = vadd.f32 %v1449, %v1571
        %v1600 = vadd.f32 %v1450, %v1576
        %v1601 = vadd.f32 %v1451, %v1579
        %v1602 = vadd.f32 %v1452, %v1584
        %v1603 = vadd.f32 %v1453, %v1587
        %v1604 = vadd.f32 %v1454, %v1592
        %v1605 = vadd.f32 %v1455, %v1595
        %v1606 = vld [vmem:[%s756 + $0x1] sm:$0xff]
        %v1607 = vld [vmem:[%s756 + $0x11] sm:$0xff]
        %v1608 = vld [vmem:[%s756 + $0x21] sm:$0xff]
        %v1609 = vld [vmem:[%s756 + $0x31] sm:$0xff]
        %v1610 = vld [vmem:[%s756 + $0x41] sm:$0xff]
        %v1611 = vld [vmem:[%s756 + $0x51] sm:$0xff]
        %v1612 = vld [vmem:[%s756 + $0x61] sm:$0xff]
        %v1613 = vld [vmem:[%s756 + $0x71] sm:$0xff]
        %v1614 = vpack.c.bf16 %v1607, %v1606
        %v1615 = vpack.c.bf16 %v1609, %v1608
        %v1616 = vpack.c.bf16 %v1611, %v1610
        %v1617 = vpack.c.bf16 %v1613, %v1612
        %s1618 = scalar_lea.vmem %s3, 320
        %v1619 = vld [vmem:[%s1618] sm:$0xf]
        %v1620 = vld [vmem:[%s1618 + $0x4] sm:$0xf]
        %v1621 = vld [vmem:[%s1618 + $0x8] sm:$0xf]
        %v1622 = vld [vmem:[%s1618 + $0xc] sm:$0xf]
        %v1623 = vld [vmem:[%s1618 + $0x10] sm:$0xf]
        %v1624 = vld [vmem:[%s1618 + $0x14] sm:$0xf]
        %v1625 = vld [vmem:[%s1618 + $0x18] sm:$0xf]
        %v1626 = vld [vmem:[%s1618 + $0x1c] sm:$0xf]
        %v1627 = vld [vmem:[%s1618 + $0x20] sm:$0xf]
        %v1628 = vld [vmem:[%s1618 + $0x24] sm:$0xf]
        %v1629 = vld [vmem:[%s1618 + $0x28] sm:$0xf]
        %v1630 = vld [vmem:[%s1618 + $0x2c] sm:$0xf]
        %v1631 = vld [vmem:[%s1618 + $0x30] sm:$0xf]
        %v1632 = vld [vmem:[%s1618 + $0x34] sm:$0xf]
        %v1633 = vld [vmem:[%s1618 + $0x38] sm:$0xf]
        %v1634 = vld [vmem:[%s1618 + $0x3c] sm:$0xf]
        %v1651 = vunpack.c.l.b16 %v1619
        %v1652 = vunpack.c.l.b16 %v1620
        %v1653 = vunpack.c.l.b16 %v1621
        %v1654 = vunpack.c.l.b16 %v1622
        %v1655 = vunpack.c.l.b16 %v1623
        %v1656 = vunpack.c.l.b16 %v1624
        %v1657 = vunpack.c.l.b16 %v1625
        %v1658 = vunpack.c.l.b16 %v1626
        %v1659 = vunpack.c.l.b16 %v1627
        %v1660 = vunpack.c.l.b16 %v1628
        %v1661 = vunpack.c.l.b16 %v1629
        %v1662 = vunpack.c.l.b16 %v1630
        %v1663 = vunpack.c.l.b16 %v1631
        %v1664 = vunpack.c.l.b16 %v1632
        %v1665 = vunpack.c.l.b16 %v1633
        %v1666 = vunpack.c.l.b16 %v1634
        %v1667 = vpack.c.b16 %v1652, %v1651
        %v1668 = vpack.c.b16 %v1654, %v1653
        %v1669 = vpack.c.b16 %v1656, %v1655
        %v1670 = vpack.c.b16 %v1658, %v1657
        %v1671 = vpack.c.b16 %v1660, %v1659
        %v1672 = vpack.c.b16 %v1662, %v1661
        %v1673 = vpack.c.b16 %v1664, %v1663
        %v1674 = vpack.c.b16 %v1666, %v1665
        %1683 = vmatprep.subr.bf16.mxu0 0
        %1684 = vmatpush1.bf16.msra.mxu0 %v1667
        %1685 = vmatprep.subr.bf16.mxu0 0
        %1686 = vmatpush1.bf16.msra.mxu0 %v1668
        %1687 = vmatprep.subr.bf16.mxu0 0
        %1688 = vmatpush1.bf16.msra.mxu0 %v1669
        %1689 = vmatprep.subr.bf16.mxu0 0
        %1690 = vmatpush1.bf16.msra.mxu0 %v1670
        %1691 = vmatprep.subr.bf16.mxu0 0
        %1692 = vmatpush1.bf16.msra.mxu0 %v1671
        %1693 = vmatprep.subr.bf16.mxu0 0
        %1694 = vmatpush1.bf16.msra.mxu0 %v1672
        %1695 = vmatprep.subr.bf16.mxu0 0
        %1696 = vmatpush1.bf16.msra.mxu0 %v1673
        %1697 = vmatprep.subr.bf16.mxu0 0
        %1698 = vmatpush1.bf16.msra.mxu0 %v1674
        %1699 = vmatprep.subr.bf16.mxu0 0
        %1700 = vmatpush1.bf16.msra.mxu0 0
        %1701 = vmatprep.subr.bf16.mxu0 0
        %1702 = vmatpush1.bf16.msra.mxu0 0
        %1703 = vmatprep.subr.bf16.mxu0 0
        %1704 = vmatpush1.bf16.msra.mxu0 0
        %1705 = vmatprep.subr.bf16.mxu0 0
        %1706 = vmatpush1.bf16.msra.mxu0 0
        %1707 = vmatprep.subr.bf16.mxu0 0
        %1708 = vmatpush1.bf16.msra.mxu0 0
        %1709 = vmatprep.subr.bf16.mxu0 0
        %1710 = vmatpush1.bf16.msra.mxu0 0
        %1711 = vmatprep.subr.bf16.mxu0 0
        %1712 = vmatpush1.bf16.msra.mxu0 0
        %1713 = vmatprep.subr.bf16.mxu0 0
        %1714 = vmatpush1.bf16.msra.mxu0 0
        %1715 = vmatprep.mubr.bf16.mxu0 0
        %1716 = vmatmul.mubr.bf16.gmra.mrb[0].mxu0 %v1614
        %v1717 = vpop.f32.mrb[0].mxu0
        %v1718 = vadd.f32 0.0, %v1717
        %v1719 = vpop.f32.mrb[0].mxu0
        %v1720 = vpop.f32.mrb[0].mxu0
        %v1721 = vadd.f32 0.0, %v1720
        %v1722 = vpop.f32.mrb[0].mxu0
        %1723 = vmatprep.mubr.bf16.mxu0 0
        %1724 = vmatmul.mubr.bf16.gmra.mrb[0].mxu0 %v1615
        %v1725 = vpop.f32.mrb[0].mxu0
        %v1726 = vadd.f32 0.0, %v1725
        %v1727 = vpop.f32.mrb[0].mxu0
        %v1728 = vpop.f32.mrb[0].mxu0
        %v1729 = vadd.f32 0.0, %v1728
        %v1730 = vpop.f32.mrb[0].mxu0
        %1731 = vmatprep.mubr.bf16.mxu0 0
        %1732 = vmatmul.mubr.bf16.gmra.mrb[0].mxu0 %v1616
        %v1733 = vpop.f32.mrb[0].mxu0
        %v1734 = vadd.f32 0.0, %v1733
        %v1735 = vpop.f32.mrb[0].mxu0
        %v1736 = vpop.f32.mrb[0].mxu0
        %v1737 = vadd.f32 0.0, %v1736
        %v1738 = vpop.f32.mrb[0].mxu0
        %1739 = vmatprep.mubr.bf16.mxu0 0
        %1740 = vmatmul.mubr.bf16.gmra.mrb[0].mxu0 %v1617
        %v1741 = vpop.f32.mrb[0].mxu0
        %v1742 = vadd.f32 0.0, %v1741
        %v1743 = vpop.f32.mrb[0].mxu0
        %v1744 = vpop.f32.mrb[0].mxu0
        %v1745 = vadd.f32 0.0, %v1744
        %v1746 = vpop.f32.mrb[0].mxu0
        %1747 = vdwg.mxu0
        %v1748 = vadd.f32 %v1598, %v1718
        %v1749 = vadd.f32 %v1599, %v1721
        %v1750 = vadd.f32 %v1600, %v1726
        %v1751 = vadd.f32 %v1601, %v1729
        %v1752 = vadd.f32 %v1602, %v1734
        %v1753 = vadd.f32 %v1603, %v1737
        %v1754 = vadd.f32 %v1604, %v1742
        %v1755 = vadd.f32 %v1605, %v1745
        %v1756 = vld [vmem:[%s542] sm:$0xff]
        %v1757 = vld [vmem:[%s542 + $0x10] sm:$0xff]
        %v1758 = vld [vmem:[%s542 + $0x20] sm:$0xff]
        %v1759 = vld [vmem:[%s542 + $0x30] sm:$0xff]
        %v1760 = vld [vmem:[%s542 + $0x40] sm:$0xff]
        %v1761 = vld [vmem:[%s542 + $0x50] sm:$0xff]
        %v1762 = vld [vmem:[%s542 + $0x60] sm:$0xff]
        %v1763 = vld [vmem:[%s542 + $0x70] sm:$0xff]
        %v1764 = vpack.c.bf16 %v1757, %v1756
        %v1765 = vpack.c.bf16 %v1759, %v1758
        %v1766 = vpack.c.bf16 %v1761, %v1760
        %v1767 = vpack.c.bf16 %v1763, %v1762
        %s1768 = scalar_lea.vmem %s3, 384
        %v1769 = vld [vmem:[%s1768] sm:$0xf]
        %v1770 = vld [vmem:[%s1768 + $0x4] sm:$0xf]
        %v1771 = vld [vmem:[%s1768 + $0x8] sm:$0xf]
        %v1772 = vld [vmem:[%s1768 + $0xc] sm:$0xf]
        %v1773 = vld [vmem:[%s1768 + $0x10] sm:$0xf]
        %v1774 = vld [vmem:[%s1768 + $0x14] sm:$0xf]
        %v1775 = vld [vmem:[%s1768 + $0x18] sm:$0xf]
        %v1776 = vld [vmem:[%s1768 + $0x1c] sm:$0xf]
        %v1777 = vld [vmem:[%s1768 + $0x20] sm:$0xf]
        %v1778 = vld [vmem:[%s1768 + $0x24] sm:$0xf]
        %v1779 = vld [vmem:[%s1768 + $0x28] sm:$0xf]
        %v1780 = vld [vmem:[%s1768 + $0x2c] sm:$0xf]
        %v1781 = vld [vmem:[%s1768 + $0x30] sm:$0xf]
        %v1782 = vld [vmem:[%s1768 + $0x34] sm:$0xf]
        %v1783 = vld [vmem:[%s1768 + $0x38] sm:$0xf]
        %v1784 = vld [vmem:[%s1768 + $0x3c] sm:$0xf]
        %v1801 = vunpack.c.l.b16 %v1769
        %v1802 = vunpack.c.l.b16 %v1770
        %v1803 = vunpack.c.l.b16 %v1771
        %v1804 = vunpack.c.l.b16 %v1772
        %v1805 = vunpack.c.l.b16 %v1773
        %v1806 = vunpack.c.l.b16 %v1774
        %v1807 = vunpack.c.l.b16 %v1775
        %v1808 = vunpack.c.l.b16 %v1776
        %v1809 = vunpack.c.l.b16 %v1777
        %v1810 = vunpack.c.l.b16 %v1778
        %v1811 = vunpack.c.l.b16 %v1779
        %v1812 = vunpack.c.l.b16 %v1780
        %v1813 = vunpack.c.l.b16 %v1781
        %v1814 = vunpack.c.l.b16 %v1782
        %v1815 = vunpack.c.l.b16 %v1783
        %v1816 = vunpack.c.l.b16 %v1784
        %v1817 = vpack.c.b16 %v1802, %v1801
        %v1818 = vpack.c.b16 %v1804, %v1803
        %v1819 = vpack.c.b16 %v1806, %v1805
        %v1820 = vpack.c.b16 %v1808, %v1807
        %v1821 = vpack.c.b16 %v1810, %v1809
        %v1822 = vpack.c.b16 %v1812, %v1811
        %v1823 = vpack.c.b16 %v1814, %v1813
        %v1824 = vpack.c.b16 %v1816, %v1815
        %1833 = vmatprep.subr.bf16.mxu0 0
        %1834 = vmatpush1.bf16.msra.mxu0 %v1817
        %1835 = vmatprep.subr.bf16.mxu0 0
        %1836 = vmatpush1.bf16.msra.mxu0 %v1818
        %1837 = vmatprep.subr.bf16.mxu0 0
        %1838 = vmatpush1.bf16.msra.mxu0 %v1819
        %1839 = vmatprep.subr.bf16.mxu0 0
        %1840 = vmatpush1.bf16.msra.mxu0 %v1820
        %1841 = vmatprep.subr.bf16.mxu0 0
        %1842 = vmatpush1.bf16.msra.mxu0 %v1821
        %1843 = vmatprep.subr.bf16.mxu0 0
        %1844 = vmatpush1.bf16.msra.mxu0 %v1822
        %1845 = vmatprep.subr.bf16.mxu0 0
        %1846 = vmatpush1.bf16.msra.mxu0 %v1823
        %1847 = vmatprep.subr.bf16.mxu0 0
        %1848 = vmatpush1.bf16.msra.mxu0 %v1824
        %1849 = vmatprep.subr.bf16.mxu0 0
        %1850 = vmatpush1.bf16.msra.mxu0 0
        %1851 = vmatprep.subr.bf16.mxu0 0
        %1852 = vmatpush1.bf16.msra.mxu0 0
        %1853 = vmatprep.subr.bf16.mxu0 0
        %1854 = vmatpush1.bf16.msra.mxu0 0
        %1855 = vmatprep.subr.bf16.mxu0 0
        %1856 = vmatpush1.bf16.msra.mxu0 0
        %1857 = vmatprep.subr.bf16.mxu0 0
        %1858 = vmatpush1.bf16.msra.mxu0 0
        %1859 = vmatprep.subr.bf16.mxu0 0
        %1860 = vmatpush1.bf16.msra.mxu0 0
        %1861 = vmatprep.subr.bf16.mxu0 0
        %1862 = vmatpush1.bf16.msra.mxu0 0
        %1863 = vmatprep.subr.bf16.mxu0 0
        %1864 = vmatpush1.bf16.msra.mxu0 0
        %1865 = vmatprep.mubr.bf16.mxu0 0
        %1866 = vmatmul.mubr.bf16.gmra.mrb[0].mxu0 %v1764
        %v1867 = vpop.f32.mrb[0].mxu0
        %v1868 = vadd.f32 0.0, %v1867
        %v1869 = vpop.f32.mrb[0].mxu0
        %v1870 = vpop.f32.mrb[0].mxu0
        %v1871 = vadd.f32 0.0, %v1870
        %v1872 = vpop.f32.mrb[0].mxu0
        %1873 = vmatprep.mubr.bf16.mxu0 0
        %1874 = vmatmul.mubr.bf16.gmra.mrb[0].mxu0 %v1765
        %v1875 = vpop.f32.mrb[0].mxu0
        %v1876 = vadd.f32 0.0, %v1875
        %v1877 = vpop.f32.mrb[0].mxu0
        %v1878 = vpop.f32.mrb[0].mxu0
        %v1879 = vadd.f32 0.0, %v1878
        %v1880 = vpop.f32.mrb[0].mxu0
        %1881 = vmatprep.mubr.bf16.mxu0 0
        %1882 = vmatmul.mubr.bf16.gmra.mrb[0].mxu0 %v1766
        %v1883 = vpop.f32.mrb[0].mxu0
        %v1884 = vadd.f32 0.0, %v1883
        %v1885 = vpop.f32.mrb[0].mxu0
        %v1886 = vpop.f32.mrb[0].mxu0
        %v1887 = vadd.f32 0.0, %v1886
        %v1888 = vpop.f32.mrb[0].mxu0
        %1889 = vmatprep.mubr.bf16.mxu0 0
        %1890 = vmatmul.mubr.bf16.gmra.mrb[0].mxu0 %v1767
        %v1891 = vpop.f32.mrb[0].mxu0
        %v1892 = vadd.f32 0.0, %v1891
        %v1893 = vpop.f32.mrb[0].mxu0
        %v1894 = vpop.f32.mrb[0].mxu0
        %v1895 = vadd.f32 0.0, %v1894
        %v1896 = vpop.f32.mrb[0].mxu0
        %1897 = vdwg.mxu0
        %v1898 = vadd.f32 %v1748, %v1868
        %v1899 = vadd.f32 %v1749, %v1871
        %v1900 = vadd.f32 %v1750, %v1876
        %v1901 = vadd.f32 %v1751, %v1879
        %v1902 = vadd.f32 %v1752, %v1884
        %v1903 = vadd.f32 %v1753, %v1887
        %v1904 = vadd.f32 %v1754, %v1892
        %v1905 = vadd.f32 %v1755, %v1895
        %v1906 = vld [vmem:[%s649] sm:$0xff]
        %v1907 = vld [vmem:[%s649 + $0x10] sm:$0xff]
        %v1908 = vld [vmem:[%s649 + $0x20] sm:$0xff]
        %v1909 = vld [vmem:[%s649 + $0x30] sm:$0xff]
        %v1910 = vld [vmem:[%s649 + $0x40] sm:$0xff]
        %v1911 = vld [vmem:[%s649 + $0x50] sm:$0xff]
        %v1912 = vld [vmem:[%s649 + $0x60] sm:$0xff]
        %v1913 = vld [vmem:[%s649 + $0x70] sm:$0xff]
        %v1914 = vpack.c.bf16 %v1907, %v1906
        %v1915 = vpack.c.bf16 %v1909, %v1908
        %v1916 = vpack.c.bf16 %v1911, %v1910
        %v1917 = vpack.c.bf16 %v1913, %v1912
        %s1918 = scalar_lea.vmem %s3, 448
        %v1919 = vld [vmem:[%s1918] sm:$0xf]
        %v1920 = vld [vmem:[%s1918 + $0x4] sm:$0xf]
        %v1921 = vld [vmem:[%s1918 + $0x8] sm:$0xf]
        %v1922 = vld [vmem:[%s1918 + $0xc] sm:$0xf]
        %v1923 = vld [vmem:[%s1918 + $0x10] sm:$0xf]
        %v1924 = vld [vmem:[%s1918 + $0x14] sm:$0xf]
        %v1925 = vld [vmem:[%s1918 + $0x18] sm:$0xf]
        %v1926 = vld [vmem:[%s1918 + $0x1c] sm:$0xf]
        %v1927 = vld [vmem:[%s1918 + $0x20] sm:$0xf]
        %v1928 = vld [vmem:[%s1918 + $0x24] sm:$0xf]
        %v1929 = vld [vmem:[%s1918 + $0x28] sm:$0xf]
        %v1930 = vld [vmem:[%s1918 + $0x2c] sm:$0xf]
        %v1931 = vld [vmem:[%s1918 + $0x30] sm:$0xf]
        %v1932 = vld [vmem:[%s1918 + $0x34] sm:$0xf]
        %v1933 = vld [vmem:[%s1918 + $0x38] sm:$0xf]
        %v1934 = vld [vmem:[%s1918 + $0x3c] sm:$0xf]
        %v1951 = vunpack.c.l.b16 %v1919
        %v1952 = vunpack.c.l.b16 %v1920
        %v1953 = vunpack.c.l.b16 %v1921
        %v1954 = vunpack.c.l.b16 %v1922
        %v1955 = vunpack.c.l.b16 %v1923
        %v1956 = vunpack.c.l.b16 %v1924
        %v1957 = vunpack.c.l.b16 %v1925
        %v1958 = vunpack.c.l.b16 %v1926
        %v1959 = vunpack.c.l.b16 %v1927
        %v1960 = vunpack.c.l.b16 %v1928
        %v1961 = vunpack.c.l.b16 %v1929
        %v1962 = vunpack.c.l.b16 %v1930
        %v1963 = vunpack.c.l.b16 %v1931
        %v1964 = vunpack.c.l.b16 %v1932
        %v1965 = vunpack.c.l.b16 %v1933
        %v1966 = vunpack.c.l.b16 %v1934
        %v1967 = vpack.c.b16 %v1952, %v1951
        %v1968 = vpack.c.b16 %v1954, %v1953
        %v1969 = vpack.c.b16 %v1956, %v1955
        %v1970 = vpack.c.b16 %v1958, %v1957
        %v1971 = vpack.c.b16 %v1960, %v1959
        %v1972 = vpack.c.b16 %v1962, %v1961
        %v1973 = vpack.c.b16 %v1964, %v1963
        %v1974 = vpack.c.b16 %v1966, %v1965
        %1983 = vmatprep.subr.bf16.mxu0 0
        %1984 = vmatpush1.bf16.msra.mxu0 %v1967
        %1985 = vmatprep.subr.bf16.mxu0 0
        %1986 = vmatpush1.bf16.msra.mxu0 %v1968
        %1987 = vmatprep.subr.bf16.mxu0 0
        %1988 = vmatpush1.bf16.msra.mxu0 %v1969
        %1989 = vmatprep.subr.bf16.mxu0 0
        %1990 = vmatpush1.bf16.msra.mxu0 %v1970
        %1991 = vmatprep.subr.bf16.mxu0 0
        %1992 = vmatpush1.bf16.msra.mxu0 %v1971
        %1993 = vmatprep.subr.bf16.mxu0 0
        %1994 = vmatpush1.bf16.msra.mxu0 %v1972
        %1995 = vmatprep.subr.bf16.mxu0 0
        %1996 = vmatpush1.bf16.msra.mxu0 %v1973
        %1997 = vmatprep.subr.bf16.mxu0 0
        %1998 = vmatpush1.bf16.msra.mxu0 %v1974
        %1999 = vmatprep.subr.bf16.mxu0 0
        %2000 = vmatpush1.bf16.msra.mxu0 0
        %2001 = vmatprep.subr.bf16.mxu0 0
        %2002 = vmatpush1.bf16.msra.mxu0 0
        %2003 = vmatprep.subr.bf16.mxu0 0
        %2004 = vmatpush1.bf16.msra.mxu0 0
        %2005 = vmatprep.subr.bf16.mxu0 0
        %2006 = vmatpush1.bf16.msra.mxu0 0
        %2007 = vmatprep.subr.bf16.mxu0 0
        %2008 = vmatpush1.bf16.msra.mxu0 0
        %2009 = vmatprep.subr.bf16.mxu0 0
        %2010 = vmatpush1.bf16.msra.mxu0 0
        %2011 = vmatprep.subr.bf16.mxu0 0
        %2012 = vmatpush1.bf16.msra.mxu0 0
        %2013 = vmatprep.subr.bf16.mxu0 0
        %2014 = vmatpush1.bf16.msra.mxu0 0
        %2015 = vmatprep.mubr.bf16.mxu0 0
        %2016 = vmatmul.mubr.bf16.gmra.mrb[0].mxu0 %v1914
        %v2017 = vpop.f32.mrb[0].mxu0
        %v2018 = vadd.f32 0.0, %v2017
        %v2019 = vpop.f32.mrb[0].mxu0
        %v2020 = vpop.f32.mrb[0].mxu0
        %v2021 = vadd.f32 0.0, %v2020
        %v2022 = vpop.f32.mrb[0].mxu0
        %2023 = vmatprep.mubr.bf16.mxu0 0
        %2024 = vmatmul.mubr.bf16.gmra.mrb[0].mxu0 %v1915
        %v2025 = vpop.f32.mrb[0].mxu0
        %v2026 = vadd.f32 0.0, %v2025
        %v2027 = vpop.f32.mrb[0].mxu0
        %v2028 = vpop.f32.mrb[0].mxu0
        %v2029 = vadd.f32 0.0, %v2028
        %v2030 = vpop.f32.mrb[0].mxu0
        %2031 = vmatprep.mubr.bf16.mxu0 0
        %2032 = vmatmul.mubr.bf16.gmra.mrb[0].mxu0 %v1916
        %v2033 = vpop.f32.mrb[0].mxu0
        %v2034 = vadd.f32 0.0, %v2033
        %v2035 = vpop.f32.mrb[0].mxu0
        %v2036 = vpop.f32.mrb[0].mxu0
        %v2037 = vadd.f32 0.0, %v2036
        %v2038 = vpop.f32.mrb[0].mxu0
        %2039 = vmatprep.mubr.bf16.mxu0 0
        %2040 = vmatmul.mubr.bf16.gmra.mrb[0].mxu0 %v1917
        %v2041 = vpop.f32.mrb[0].mxu0
        %v2042 = vadd.f32 0.0, %v2041
        %v2043 = vpop.f32.mrb[0].mxu0
        %v2044 = vpop.f32.mrb[0].mxu0
        %v2045 = vadd.f32 0.0, %v2044
        %v2046 = vpop.f32.mrb[0].mxu0
        %2047 = vdwg.mxu0
        %v2048 = vadd.f32 %v1898, %v2018
        %v2049 = vadd.f32 %v1899, %v2021
        %v2050 = vadd.f32 %v1900, %v2026
        %v2051 = vadd.f32 %v1901, %v2029
        %v2052 = vadd.f32 %v1902, %v2034
        %v2053 = vadd.f32 %v1903, %v2037
        %v2054 = vadd.f32 %v1904, %v2042
        %v2055 = vadd.f32 %v1905, %v2045
        %v2056 = vld [vmem:[%s542 + $0x1] sm:$0xff]
        %v2057 = vld [vmem:[%s542 + $0x11] sm:$0xff]
        %v2058 = vld [vmem:[%s542 + $0x21] sm:$0xff]
        %v2059 = vld [vmem:[%s542 + $0x31] sm:$0xff]
        %v2060 = vld [vmem:[%s542 + $0x41] sm:$0xff]
        %v2061 = vld [vmem:[%s542 + $0x51] sm:$0xff]
        %v2062 = vld [vmem:[%s542 + $0x61] sm:$0xff]
        %v2063 = vld [vmem:[%s542 + $0x71] sm:$0xff]
        %v2064 = vpack.c.bf16 %v2057, %v2056
        %v2065 = vpack.c.bf16 %v2059, %v2058
        %v2066 = vpack.c.bf16 %v2061, %v2060
        %v2067 = vpack.c.bf16 %v2063, %v2062
        %s2068 = scalar_lea.vmem %s3, 512
        %v2069 = vld [vmem:[%s2068] sm:$0xf]
        %v2070 = vld [vmem:[%s2068 + $0x4] sm:$0xf]
        %v2071 = vld [vmem:[%s2068 + $0x8] sm:$0xf]
        %v2072 = vld [vmem:[%s2068 + $0xc] sm:$0xf]
        %v2073 = vld [vmem:[%s2068 + $0x10] sm:$0xf]
        %v2074 = vld [vmem:[%s2068 + $0x14] sm:$0xf]
        %v2075 = vld [vmem:[%s2068 + $0x18] sm:$0xf]
        %v2076 = vld [vmem:[%s2068 + $0x1c] sm:$0xf]
        %v2077 = vld [vmem:[%s2068 + $0x20] sm:$0xf]
        %v2078 = vld [vmem:[%s2068 + $0x24] sm:$0xf]
        %v2079 = vld [vmem:[%s2068 + $0x28] sm:$0xf]
        %v2080 = vld [vmem:[%s2068 + $0x2c] sm:$0xf]
        %v2081 = vld [vmem:[%s2068 + $0x30] sm:$0xf]
        %v2082 = vld [vmem:[%s2068 + $0x34] sm:$0xf]
        %v2083 = vld [vmem:[%s2068 + $0x38] sm:$0xf]
        %v2084 = vld [vmem:[%s2068 + $0x3c] sm:$0xf]
        %v2101 = vunpack.c.l.b16 %v2069
        %v2102 = vunpack.c.l.b16 %v2070
        %v2103 = vunpack.c.l.b16 %v2071
        %v2104 = vunpack.c.l.b16 %v2072
        %v2105 = vunpack.c.l.b16 %v2073
        %v2106 = vunpack.c.l.b16 %v2074
        %v2107 = vunpack.c.l.b16 %v2075
        %v2108 = vunpack.c.l.b16 %v2076
        %v2109 = vunpack.c.l.b16 %v2077
        %v2110 = vunpack.c.l.b16 %v2078
        %v2111 = vunpack.c.l.b16 %v2079
        %v2112 = vunpack.c.l.b16 %v2080
        %v2113 = vunpack.c.l.b16 %v2081
        %v2114 = vunpack.c.l.b16 %v2082
        %v2115 = vunpack.c.l.b16 %v2083
        %v2116 = vunpack.c.l.b16 %v2084
        %v2117 = vpack.c.b16 %v2102, %v2101
        %v2118 = vpack.c.b16 %v2104, %v2103
        %v2119 = vpack.c.b16 %v2106, %v2105
        %v2120 = vpack.c.b16 %v2108, %v2107
        %v2121 = vpack.c.b16 %v2110, %v2109
        %v2122 = vpack.c.b16 %v2112, %v2111
        %v2123 = vpack.c.b16 %v2114, %v2113
        %v2124 = vpack.c.b16 %v2116, %v2115
        %2133 = vmatprep.subr.bf16.mxu0 0
        %2134 = vmatpush1.bf16.msra.mxu0 %v2117
        %2135 = vmatprep.subr.bf16.mxu0 0
        %2136 = vmatpush1.bf16.msra.mxu0 %v2118
        %2137 = vmatprep.subr.bf16.mxu0 0
        %2138 = vmatpush1.bf16.msra.mxu0 %v2119
        %2139 = vmatprep.subr.bf16.mxu0 0
        %2140 = vmatpush1.bf16.msra.mxu0 %v2120
        %2141 = vmatprep.subr.bf16.mxu0 0
        %2142 = vmatpush1.bf16.msra.mxu0 %v2121
        %2143 = vmatprep.subr.bf16.mxu0 0
        %2144 = vmatpush1.bf16.msra.mxu0 %v2122
        %2145 = vmatprep.subr.bf16.mxu0 0
        %2146 = vmatpush1.bf16.msra.mxu0 %v2123
        %2147 = vmatprep.subr.bf16.mxu0 0
        %2148 = vmatpush1.bf16.msra.mxu0 %v2124
        %2149 = vmatprep.subr.bf16.mxu0 0
        %2150 = vmatpush1.bf16.msra.mxu0 0
        %2151 = vmatprep.subr.bf16.mxu0 0
        %2152 = vmatpush1.bf16.msra.mxu0 0
        %2153 = vmatprep.subr.bf16.mxu0 0
        %2154 = vmatpush1.bf16.msra.mxu0 0
        %2155 = vmatprep.subr.bf16.mxu0 0
        %2156 = vmatpush1.bf16.msra.mxu0 0
        %2157 = vmatprep.subr.bf16.mxu0 0
        %2158 = vmatpush1.bf16.msra.mxu0 0
        %2159 = vmatprep.subr.bf16.mxu0 0
        %2160 = vmatpush1.bf16.msra.mxu0 0
        %2161 = vmatprep.subr.bf16.mxu0 0
        %2162 = vmatpush1.bf16.msra.mxu0 0
        %2163 = vmatprep.subr.bf16.mxu0 0
        %2164 = vmatpush1.bf16.msra.mxu0 0
        %2165 = vmatprep.mubr.bf16.mxu0 0
        %2166 = vmatmul.mubr.bf16.gmra.mrb[0].mxu0 %v2064
        %v2167 = vpop.f32.mrb[0].mxu0
        %v2168 = vadd.f32 0.0, %v2167
        %v2169 = vpop.f32.mrb[0].mxu0
        %v2170 = vpop.f32.mrb[0].mxu0
        %v2171 = vadd.f32 0.0, %v2170
        %v2172 = vpop.f32.mrb[0].mxu0
        %2173 = vmatprep.mubr.bf16.mxu0 0
        %2174 = vmatmul.mubr.bf16.gmra.mrb[0].mxu0 %v2065
        %v2175 = vpop.f32.mrb[0].mxu0
        %v2176 = vadd.f32 0.0, %v2175
        %v2177 = vpop.f32.mrb[0].mxu0
        %v2178 = vpop.f32.mrb[0].mxu0
        %v2179 = vadd.f32 0.0, %v2178
        %v2180 = vpop.f32.mrb[0].mxu0
        %2181 = vmatprep.mubr.bf16.mxu0 0
        %2182 = vmatmul.mubr.bf16.gmra.mrb[0].mxu0 %v2066
        %v2183 = vpop.f32.mrb[0].mxu0
        %v2184 = vadd.f32 0.0, %v2183
        %v2185 = vpop.f32.mrb[0].mxu0
        %v2186 = vpop.f32.mrb[0].mxu0
        %v2187 = vadd.f32 0.0, %v2186
        %v2188 = vpop.f32.mrb[0].mxu0
        %2189 = vmatprep.mubr.bf16.mxu0 0
        %2190 = vmatmul.mubr.bf16.gmra.mrb[0].mxu0 %v2067
        %v2191 = vpop.f32.mrb[0].mxu0
        %v2192 = vadd.f32 0.0, %v2191
        %v2193 = vpop.f32.mrb[0].mxu0
        %v2194 = vpop.f32.mrb[0].mxu0
        %v2195 = vadd.f32 0.0, %v2194
        %v2196 = vpop.f32.mrb[0].mxu0
        %2197 = vdwg.mxu0
        %v2198 = vadd.f32 %v2048, %v2168
        %v2199 = vadd.f32 %v2049, %v2171
        %v2200 = vadd.f32 %v2050, %v2176
        %v2201 = vadd.f32 %v2051, %v2179
        %v2202 = vadd.f32 %v2052, %v2184
        %v2203 = vadd.f32 %v2053, %v2187
        %v2204 = vadd.f32 %v2054, %v2192
        %v2205 = vadd.f32 %v2055, %v2195
        %v2206 = vld [vmem:[%s4] sm:$0x1]
        %v2208 = vlaneseq
        %v2209 = vshrl.u32 %v2208, 7
        %v2210 = vsub.s32 0, %v2209
        %v2211 = vrot.slane %v2206, %v2210
        %v2213 = vadd.f32 %v2198, %v2211
        %v2214 = vadd.f32 %v2199, %v2211
        %v2215 = vadd.f32 %v2200, %v2211
        %v2216 = vadd.f32 %v2201, %v2211
        %v2217 = vadd.f32 %v2202, %v2211
        %v2218 = vadd.f32 %v2203, %v2211
        %v2219 = vadd.f32 %v2204, %v2211
        %v2220 = vadd.f32 %v2205, %v2211
        %v2221 = vmax.f32 %v2213, 0.0
        %v2222 = vmax.f32 %v2214, 0.0
        %v2223 = vmax.f32 %v2215, 0.0
        %v2224 = vmax.f32 %v2216, 0.0
        %v2225 = vmax.f32 %v2217, 0.0
        %v2226 = vmax.f32 %v2218, 0.0
        %v2227 = vmax.f32 %v2219, 0.0
        %v2228 = vmax.f32 %v2220, 0.0
        %v2229 = vpack.c.bf16 %v2222, %v2221
        %v2230 = vpack.c.bf16 %v2224, %v2223
        %v2231 = vpack.c.bf16 %v2226, %v2225
        %v2232 = vpack.c.bf16 %v2228, %v2227
        %v2233 = vld [vmem:[%s5] sm:$0xf]
        %v2234 = vld [vmem:[%s5 + $0x4] sm:$0xf]
        %v2235 = vld [vmem:[%s5 + $0x8] sm:$0xf]
        %v2236 = vld [vmem:[%s5 + $0xc] sm:$0xf]
        %v2237 = vld [vmem:[%s5 + $0x10] sm:$0xf]
        %v2238 = vld [vmem:[%s5 + $0x14] sm:$0xf]
        %v2239 = vld [vmem:[%s5 + $0x18] sm:$0xf]
        %v2240 = vld [vmem:[%s5 + $0x1c] sm:$0xf]
        %v2241 = vld [vmem:[%s5 + $0x20] sm:$0xf]
        %v2242 = vld [vmem:[%s5 + $0x24] sm:$0xf]
        %v2243 = vld [vmem:[%s5 + $0x28] sm:$0xf]
        %v2244 = vld [vmem:[%s5 + $0x2c] sm:$0xf]
        %v2245 = vld [vmem:[%s5 + $0x30] sm:$0xf]
        %v2246 = vld [vmem:[%s5 + $0x34] sm:$0xf]
        %v2247 = vld [vmem:[%s5 + $0x38] sm:$0xf]
        %v2248 = vld [vmem:[%s5 + $0x3c] sm:$0xf]
        %v2249 = vld [vmem:[%s6] sm:$0x1]
        %v2251 = vlaneseq
        %v2252 = vshrl.u32 %v2251, 7
        %v2253 = vsub.s32 0, %v2252
        %v2254 = vrot.slane %v2249, %v2253
        %v2272 = vunpack.c.l.b16 %v2233
        %v2273 = vunpack.c.l.b16 %v2234
        %v2274 = vunpack.c.l.b16 %v2235
        %v2275 = vunpack.c.l.b16 %v2236
        %v2276 = vunpack.c.l.b16 %v2237
        %v2277 = vunpack.c.l.b16 %v2238
        %v2278 = vunpack.c.l.b16 %v2239
        %v2279 = vunpack.c.l.b16 %v2240
        %v2280 = vunpack.c.l.b16 %v2241
        %v2281 = vunpack.c.l.b16 %v2242
        %v2282 = vunpack.c.l.b16 %v2243
        %v2283 = vunpack.c.l.b16 %v2244
        %v2284 = vunpack.c.l.b16 %v2245
        %v2285 = vunpack.c.l.b16 %v2246
        %v2286 = vunpack.c.l.b16 %v2247
        %v2287 = vunpack.c.l.b16 %v2248
        %v2288 = vpack.c.b16 %v2273, %v2272
        %v2289 = vpack.c.b16 %v2275, %v2274
        %v2290 = vpack.c.b16 %v2277, %v2276
        %v2291 = vpack.c.b16 %v2279, %v2278
        %v2292 = vpack.c.b16 %v2281, %v2280
        %v2293 = vpack.c.b16 %v2283, %v2282
        %v2294 = vpack.c.b16 %v2285, %v2284
        %v2295 = vpack.c.b16 %v2287, %v2286
        %2304 = vmatprep.subr.bf16.mxu0 0
        %2305 = vmatpush1.bf16.msra.mxu0 %v2288
        %2306 = vmatprep.subr.bf16.mxu0 0
        %2307 = vmatpush1.bf16.msra.mxu0 %v2289
        %2308 = vmatprep.subr.bf16.mxu0 0
        %2309 = vmatpush1.bf16.msra.mxu0 %v2290
        %2310 = vmatprep.subr.bf16.mxu0 0
        %2311 = vmatpush1.bf16.msra.mxu0 %v2291
        %2312 = vmatprep.subr.bf16.mxu0 0
        %2313 = vmatpush1.bf16.msra.mxu0 %v2292
        %2314 = vmatprep.subr.bf16.mxu0 0
        %2315 = vmatpush1.bf16.msra.mxu0 %v2293
        %2316 = vmatprep.subr.bf16.mxu0 0
        %2317 = vmatpush1.bf16.msra.mxu0 %v2294
        %2318 = vmatprep.subr.bf16.mxu0 0
        %2319 = vmatpush1.bf16.msra.mxu0 %v2295
        %2320 = vmatprep.subr.bf16.mxu0 0
        %2321 = vmatpush1.bf16.msra.mxu0 0
        %2322 = vmatprep.subr.bf16.mxu0 0
        %2323 = vmatpush1.bf16.msra.mxu0 0
        %2324 = vmatprep.subr.bf16.mxu0 0
        %2325 = vmatpush1.bf16.msra.mxu0 0
        %2326 = vmatprep.subr.bf16.mxu0 0
        %2327 = vmatpush1.bf16.msra.mxu0 0
        %2328 = vmatprep.subr.bf16.mxu0 0
        %2329 = vmatpush1.bf16.msra.mxu0 0
        %2330 = vmatprep.subr.bf16.mxu0 0
        %2331 = vmatpush1.bf16.msra.mxu0 0
        %2332 = vmatprep.subr.bf16.mxu0 0
        %2333 = vmatpush1.bf16.msra.mxu0 0
        %2334 = vmatprep.subr.bf16.mxu0 0
        %2335 = vmatpush1.bf16.msra.mxu0 0
        %2336 = vmatprep.mubr.bf16.mxu0 0
        %2337 = vmatmul.mubr.bf16.gmra.mrb[0].mxu0 %v2229
        %v2338 = vpop.f32.mrb[0].mxu0
        %v2339 = vadd.f32 %v2254, %v2338
        %v2340 = vpop.f32.mrb[0].mxu0
        %v2341 = vpop.f32.mrb[0].mxu0
        %v2342 = vadd.f32 %v2254, %v2341
        %v2343 = vpop.f32.mrb[0].mxu0
        %2344 = vmatprep.mubr.bf16.mxu0 0
        %2345 = vmatmul.mubr.bf16.gmra.mrb[0].mxu0 %v2230
        %v2346 = vpop.f32.mrb[0].mxu0
        %v2347 = vadd.f32 %v2254, %v2346
        %v2348 = vpop.f32.mrb[0].mxu0
        %v2349 = vpop.f32.mrb[0].mxu0
        %v2350 = vadd.f32 %v2254, %v2349
        %v2351 = vpop.f32.mrb[0].mxu0
        %2352 = vmatprep.mubr.bf16.mxu0 0
        %2353 = vmatmul.mubr.bf16.gmra.mrb[0].mxu0 %v2231
        %v2354 = vpop.f32.mrb[0].mxu0
        %v2355 = vadd.f32 %v2254, %v2354
        %v2356 = vpop.f32.mrb[0].mxu0
        %v2357 = vpop.f32.mrb[0].mxu0
        %v2358 = vadd.f32 %v2254, %v2357
        %v2359 = vpop.f32.mrb[0].mxu0
        %2360 = vmatprep.mubr.bf16.mxu0 0
        %2361 = vmatmul.mubr.bf16.gmra.mrb[0].mxu0 %v2232
        %v2362 = vpop.f32.mrb[0].mxu0
        %v2363 = vadd.f32 %v2254, %v2362
        %v2364 = vpop.f32.mrb[0].mxu0
        %v2365 = vpop.f32.mrb[0].mxu0
        %v2366 = vadd.f32 %v2254, %v2365
        %v2367 = vpop.f32.mrb[0].mxu0
        %2368 = vdwg.mxu0
        %v2369 = vld [vmem:[%s765] sm:$0xff]
        %v2370 = vld [vmem:[%s765 + $0x10] sm:$0xff]
        %v2371 = vld [vmem:[%s765 + $0x20] sm:$0xff]
        %v2372 = vld [vmem:[%s765 + $0x30] sm:$0xff]
        %v2373 = vld [vmem:[%s765 + $0x40] sm:$0xff]
        %v2374 = vld [vmem:[%s765 + $0x50] sm:$0xff]
        %v2375 = vld [vmem:[%s765 + $0x60] sm:$0xff]
        %v2376 = vld [vmem:[%s765 + $0x70] sm:$0xff]
        %v2377 = vpack.c.bf16 %v2370, %v2369
        %v2378 = vpack.c.bf16 %v2372, %v2371
        %v2379 = vpack.c.bf16 %v2374, %v2373
        %v2380 = vpack.c.bf16 %v2376, %v2375
        %v2381 = vld [vmem:[%s7] sm:$0xf]
        %v2382 = vld [vmem:[%s7 + $0x4] sm:$0xf]
        %v2383 = vld [vmem:[%s7 + $0x8] sm:$0xf]
        %v2384 = vld [vmem:[%s7 + $0xc] sm:$0xf]
        %v2385 = vld [vmem:[%s7 + $0x10] sm:$0xf]
        %v2386 = vld [vmem:[%s7 + $0x14] sm:$0xf]
        %v2387 = vld [vmem:[%s7 + $0x18] sm:$0xf]
        %v2388 = vld [vmem:[%s7 + $0x1c] sm:$0xf]
        %v2397 = vunpack.c.l.b16 %v2381
        %v2398 = vunpack.c.l.b16 %v2382
        %v2399 = vunpack.c.l.b16 %v2383
        %v2400 = vunpack.c.l.b16 %v2384
        %v2401 = vunpack.c.l.b16 %v2385
        %v2402 = vunpack.c.l.b16 %v2386
        %v2403 = vunpack.c.l.b16 %v2387
        %v2404 = vunpack.c.l.b16 %v2388
        %v2405 = vpack.c.b16 %v2398, %v2397
        %v2406 = vpack.c.b16 %v2400, %v2399
        %v2407 = vpack.c.b16 %v2402, %v2401
        %v2408 = vpack.c.b16 %v2404, %v2403
        %v2414 = vsel %vm456, %v2377, 0
        %v2417 = vsel %vm456, %v2378, 0
        %v2420 = vsel %vm456, %v2379, 0
        %v2423 = vsel %vm456, %v2380, 0
        %2425 = vmatprep.subr.bf16.mxu0 0
        %2426 = vmatpush1.bf16.msra.mxu0 %v2405
        %2427 = vmatprep.subr.bf16.mxu0 0
        %2428 = vmatpush1.bf16.msra.mxu0 %v2406
        %2429 = vmatprep.subr.bf16.mxu0 0
        %2430 = vmatpush1.bf16.msra.mxu0 %v2407
        %2431 = vmatprep.subr.bf16.mxu0 0
        %2432 = vmatpush1.bf16.msra.mxu0 %v2408
        %2433 = vmatprep.subr.bf16.mxu0 0
        %2434 = vmatpush1.bf16.msra.mxu0 0
        %2435 = vmatprep.subr.bf16.mxu0 0
        %2436 = vmatpush1.bf16.msra.mxu0 0
        %2437 = vmatprep.subr.bf16.mxu0 0
        %2438 = vmatpush1.bf16.msra.mxu0 0
        %2439 = vmatprep.subr.bf16.mxu0 0
        %2440 = vmatpush1.bf16.msra.mxu0 0
        %2441 = vmatprep.subr.bf16.mxu0 0
        %2442 = vmatpush1.bf16.msra.mxu0 0
        %2443 = vmatprep.subr.bf16.mxu0 0
        %2444 = vmatpush1.bf16.msra.mxu0 0
        %2445 = vmatprep.subr.bf16.mxu0 0
        %2446 = vmatpush1.bf16.msra.mxu0 0
        %2447 = vmatprep.subr.bf16.mxu0 0
        %2448 = vmatpush1.bf16.msra.mxu0 0
        %2449 = vmatprep.subr.bf16.mxu0 0
        %2450 = vmatpush1.bf16.msra.mxu0 0
        %2451 = vmatprep.subr.bf16.mxu0 0
        %2452 = vmatpush1.bf16.msra.mxu0 0
        %2453 = vmatprep.subr.bf16.mxu0 0
        %2454 = vmatpush1.bf16.msra.mxu0 0
        %2455 = vmatprep.subr.bf16.mxu0 0
        %2456 = vmatpush1.bf16.msra.mxu0 0
        %2457 = vmatprep.mubr.bf16.mxu0 0
        %2458 = vmatmul.mubr.bf16.gmra.mrb[0].mxu0 %v2414
        %v2459 = vpop.f32.mrb[0].mxu0
        %v2460 = vadd.f32 0.0, %v2459
        %v2461 = vpop.f32.mrb[0].mxu0
        %v2462 = vpop.f32.mrb[0].mxu0
        %v2463 = vadd.f32 0.0, %v2462
        %v2464 = vpop.f32.mrb[0].mxu0
        %2465 = vmatprep.mubr.bf16.mxu0 0
        %2466 = vmatmul.mubr.bf16.gmra.mrb[0].mxu0 %v2417
        %v2467 = vpop.f32.mrb[0].mxu0
        %v2468 = vadd.f32 0.0, %v2467
        %v2469 = vpop.f32.mrb[0].mxu0
        %v2470 = vpop.f32.mrb[0].mxu0
        %v2471 = vadd.f32 0.0, %v2470
        %v2472 = vpop.f32.mrb[0].mxu0
        %2473 = vmatprep.mubr.bf16.mxu0 0
        %2474 = vmatmul.mubr.bf16.gmra.mrb[0].mxu0 %v2420
        %v2475 = vpop.f32.mrb[0].mxu0
        %v2476 = vadd.f32 0.0, %v2475
        %v2477 = vpop.f32.mrb[0].mxu0
        %v2478 = vpop.f32.mrb[0].mxu0
        %v2479 = vadd.f32 0.0, %v2478
        %v2480 = vpop.f32.mrb[0].mxu0
        %2481 = vmatprep.mubr.bf16.mxu0 0
        %2482 = vmatmul.mubr.bf16.gmra.mrb[0].mxu0 %v2423
        %v2483 = vpop.f32.mrb[0].mxu0
        %v2484 = vadd.f32 0.0, %v2483
        %v2485 = vpop.f32.mrb[0].mxu0
        %v2486 = vpop.f32.mrb[0].mxu0
        %v2487 = vadd.f32 0.0, %v2486
        %v2488 = vpop.f32.mrb[0].mxu0
        %2489 = vdwg.mxu0
        %v2490 = vadd.f32 %v2339, %v2460
        %v2491 = vadd.f32 %v2342, %v2463
        %v2492 = vadd.f32 %v2347, %v2468
        %v2493 = vadd.f32 %v2350, %v2471
        %v2494 = vadd.f32 %v2355, %v2476
        %v2495 = vadd.f32 %v2358, %v2479
        %v2496 = vadd.f32 %v2363, %v2484
        %v2497 = vadd.f32 %v2366, %v2487
        %v2498 = vld [vmem:[%s8] sm:$0x1]
        %v2500 = vlaneseq
        %v2501 = vshrl.u32 %v2500, 7
        %v2502 = vsub.s32 0, %v2501
        %v2503 = vrot.slane %v2498, %v2502
        %v2505 = vadd.f32 %v2490, %v2503
        %v2506 = vadd.f32 %v2491, %v2503
        %v2507 = vadd.f32 %v2492, %v2503
        %v2508 = vadd.f32 %v2493, %v2503
        %v2509 = vadd.f32 %v2494, %v2503
        %v2510 = vadd.f32 %v2495, %v2503
        %v2511 = vadd.f32 %v2496, %v2503
        %v2512 = vadd.f32 %v2497, %v2503
        %v2513 = vmax.f32 %v2505, 0.0
        %v2514 = vmax.f32 %v2506, 0.0
        %v2515 = vmax.f32 %v2507, 0.0
        %v2516 = vmax.f32 %v2508, 0.0
        %v2517 = vmax.f32 %v2509, 0.0
        %v2518 = vmax.f32 %v2510, 0.0
        %v2519 = vmax.f32 %v2511, 0.0
        %v2520 = vmax.f32 %v2512, 0.0
        %v2521 = vpack.c.bf16 %v2514, %v2513
        %v2522 = vpack.c.bf16 %v2516, %v2515
        %v2523 = vpack.c.bf16 %v2518, %v2517
        %v2524 = vpack.c.bf16 %v2520, %v2519
        %v2529 = vunpack.c.l.b16 %v2521
        %v2530 = vunpack.c.h.b16 %v2521
        %v2531 = vunpack.c.l.b16 %v2522
        %v2532 = vunpack.c.h.b16 %v2522
        %v2533 = vunpack.c.l.b16 %v2523
        %v2534 = vunpack.c.h.b16 %v2523
        %v2535 = vunpack.c.l.b16 %v2524
        %v2536 = vunpack.c.h.b16 %v2524
        %v2537 = vpack.c.b16 %v2529, %v2529
        %v2538 = vpack.c.b16 %v2530, %v2530
        %v2539 = vpack.c.b16 %v2531, %v2531
        %v2540 = vpack.c.b16 %v2532, %v2532
        %v2541 = vpack.c.b16 %v2533, %v2533
        %v2542 = vpack.c.b16 %v2534, %v2534
        %v2543 = vpack.c.b16 %v2535, %v2535
        %v2544 = vpack.c.b16 %v2536, %v2536
        %2553 = vst [vmem:[%s325] sm:$0xf] %v2537
        %2554 = vst [vmem:[%s325 + $0x4] sm:$0xf] %v2538
        %2555 = vst [vmem:[%s325 + $0x8] sm:$0xf] %v2539
        %2556 = vst [vmem:[%s325 + $0xc] sm:$0xf] %v2540
        %2557 = vst [vmem:[%s325 + $0x10] sm:$0xf] %v2541
        %2558 = vst [vmem:[%s325 + $0x14] sm:$0xf] %v2542
        %2559 = vst [vmem:[%s325 + $0x18] sm:$0xf] %v2543
        %2560 = vst [vmem:[%s325 + $0x1c] sm:$0xf] %v2544
        %s2561 = sand.u32 %s225, 1
        %s2562 = scalar_lea.sflag [#allocation4], %s2561
        %s2563 = sand.u32 %s225, 1
        %s2564 = smul.addr %s2563, 32
        %s2565 = scalar_lea.vmem [#allocation3], %s2564
        // Predicated region
        $region57: #{tpu_custom_call.1} parent=55 // pred_check
          %p2566 = pneg %p235
        $region58: #{tpu_custom_call.1} parent=55 // pred_check_branch
          %2568 = sbr.rel (%p2566) target = $region60
        $region59: #{tpu_custom_call.1} parent=55 // pred_region
          %s2570 = ssub.s32 512, 512
          %2571 = vsyncadd %s2562, %s2570
          %s2572 = smul.addr %s23, 8
          %s2573 = smul.addr %s2572, 64
          %s2574 = scalar_lea.hbm %s9, %s2573
          %s2575 = sshll.u32 %s2565, 4
          %s2576 = int_to_ptr.vmem [resolvable:$true] %s2575
          %2581 = dma.vmem_to_hbm [thread:$0]  %s2576, 512, %s2574, %s2562, 64, 64, 4
        $region60: #{tpu_custom_call.1} parent=55 // pred_fallthru
          _
      $region56: #{tpu_custom_call.1} parent=5 // pred_fallthru
        _
      %p2582 = scmp.le.s32.totalorder 2, %s18
      // Predicated region
      $region61: #{tpu_custom_call.1} parent=5 // pred_check
        %p2583 = pneg %p2582
      $region62: #{tpu_custom_call.1} parent=5 // pred_check_branch
        %2585 = sbr.rel (%p2583) target = $region64
      $region63: #{tpu_custom_call.1} parent=5 // pred_region
        %s2586 = ssub.s32 %s18, 2
        // Predicated region
        $region65: #{tpu_custom_call.1} parent=63 // pred_check
          %p2587 = pneg %p241
        $region66: #{tpu_custom_call.1} parent=63 // pred_check_branch
          %2589 = sbr.rel (%p2587) target = $region68
        $region67: #{tpu_custom_call.1} parent=63 // pred_region
          %s2590 = sand.u32 %s226, 1
          %s2591 = scalar_lea.sflag [#allocation4], %s2590
          %s2592 = sand.u32 %s226, 1
          %s2593 = smul.addr %s2592, 32
          %s2594 = scalar_lea.vmem [#allocation3], %s2593
          %2595 = dma.done %s2591, 512
        $region68: #{tpu_custom_call.1} parent=63 // pred_fallthru
          _
      $region64: #{tpu_custom_call.1} parent=5 // pred_fallthru
        _
    $region6: #{tpu_custom_call.1} parent=1 // loop_footer
      %s22 = sadd.s32 1, %s18
    $region7: #{tpu_custom_call.1} parent=1 // loop_footer_branch
      %17 = sbr.rel target = $region3
    $region8: #{tpu_custom_call.1} parent=1 // loop_exit
      _
    %2596 = vsyncpa [#allocation4], 1
    %s2597 = scalar_lea.sflag [#allocation4], 1
    %2598 = vsyncpa %s2597, 1

</llo_original>
